<compile_context>
chip_gen: v5e
topology: v5e:2x2
jax: 0.10.0
libtpu: 0.0.40
codegen_flags: <defaults>
</compile_context>

<pallas_src>
import functools
import math

import jax
import jax.numpy as jnp
from jax import lax
from jax.experimental import pallas as pl
from jax.experimental.pallas import tpu as pltpu


def _round_up(a, b):
    return -(-a // b) * b


def _vmem_limit(per_step_bytes):
    """vmem_limit_bytes from the actual per-step footprint, capped at ~half
    the physical per-core VMEM (v7x only has 64 MiB physical)."""
    cap = 64 * 1024 * 1024
    try:
        cap = int(pltpu.get_tpu_info().vmem_capacity_bytes) // 2
    except Exception:
        pass
    want = max(16 * 1024 * 1024, 2 * int(per_step_bytes))
    return int(min(cap, want))


# ---------------------------------------------------------------------------
# Kernel A (fused frequency branch):
#   conv3x3(C -> C2) + LeakyReLU(0.1) + conv3x3(C2 -> C) on the magnitude
#   spectrum, then (magnitude, phase) -> (real, imag).
# Layout: channel-major, flattened padded spatial extent on the lane axis.
# Each conv is a single K = 9*Cin MXU matmul over sublane-stacked tap slices.
#   mag_ref : (1, C,  Lpad)   zero-padded |X|, flattened, lane-dense
#   ure_ref : (1, C,  Lo)     Re(X)/|X|  (== cos(angle X)),  Lo-layout
#   uim_ref : (1, C,  Lo)     Im(X)/|X|  (== sin(angle X)),  Lo-layout
#   w1_ref  : (C2, 9*C)       tap-packed conv1 weight
#   w2_ref  : (C,  9*C2)      tap-packed conv2 weight
# ---------------------------------------------------------------------------
def _freq_kernel(mag_ref, ure_ref, uim_ref, w1_ref, b1_ref, w2_ref, b2_ref,
                 real_ref, imag_ref, *, H, Wf, Wp, Lpad):
    Lo = H * Wp
    taps = [dy * Wp + dx for dy in range(3) for dx in range(3)]

    # ---- conv1: single (C2, 9C) @ (9C, Lo) MXU matmul ---------------------
    mag = mag_ref[0]                                               # (C, Lpad)
    p1 = jnp.concatenate([mag[:, o:o + Lo] for o in taps], axis=0)  # (9C, Lo)
    h = jnp.dot(w1_ref[...], p1, preferred_element_type=jnp.float32)
    h = h + b1_ref[...]
    h = jnp.maximum(h, 0.1 * h)                                    # LeakyReLU

    # Zero the wrap columns (flat col >= Wf) and rebuild the 'same'-padded
    # layout of the activation entirely in VMEM at lane offset Wp+1 -- the
    # intermediate never touches HBM.
    col = lax.broadcasted_iota(jnp.int32, (1, Lo), 1) % Wp
    h = jnp.where(col < Wf, h, 0.0)
    c2 = h.shape[0]
    hpad = jnp.concatenate(
        [jnp.zeros((c2, Wp + 1), jnp.float32),
         h,
         jnp.zeros((c2, Lpad - (Wp + 1) - Lo), jnp.float32)], axis=1)

    # ---- conv2: single (C, 9C2) @ (9C2, Lo) MXU matmul --------------------
    p2 = jnp.concatenate([hpad[:, o:o + Lo] for o in taps], axis=0)
    m = jnp.dot(w2_ref[...], p2, preferred_element_type=jnp.float32)
    m = m + b2_ref[...]

    # (magnitude, phase) -> (real, imag); ure/uim are zero on wrap columns.
    real_ref[0] = m * ure_ref[0]
    imag_ref[0] = m * uim_ref[0]


# ---------------------------------------------------------------------------
# Kernel B: residual gating + 1x1 conv (fre_output), channel-major and
# lane-dense over the flattened spatial extent.
#   out = W_out @ (x + (x * x_out) * gamma) + b_out
# ---------------------------------------------------------------------------
def _spatial_kernel(x_ref, xo_ref, g_ref, w_ref, b_ref, out_ref):
    xv = x_ref[0]                                                  # (C, TS)
    xo = xo_ref[0]                                                 # (C, TS)
    y = xv + (xv * xo) * g_ref[...]                                # gamma (C,1)
    out_ref[0] = (jnp.dot(w_ref[...], y, preferred_element_type=jnp.float32)
                  + b_ref[...])


# ---------------------------------------------------------------------------
# Wrapper
# ---------------------------------------------------------------------------
def fre_layer_forward(x, params):
    """FreLayer forward.  x: (N, C, H, W) float32 -> (N, C, H, W)."""
    N, C, H, W = x.shape
    Wf = W // 2 + 1
    C2 = params["b1"].shape[0]

    # Row stride of the flattened layout: >= Wf+2 ('same' conv pad), rounded
    # up when cheap so Lo = H*Wp is a multiple of 128 (unmasked stores).
    Wp = Wf + 2
    step = 128 // math.gcd(H, 128)
    if _round_up(Wp, step) <= Wp + 8:
        Wp = _round_up(Wp, step)
    Lo = H * Wp                       # flattened conv-output extent
    Lpad = (H + 3) * Wp               # flattened padded-input extent (+slack)

    # TODO(synk): rfft2 / irfft2 have no Pallas TPU primitive -> plain JAX.
    xf = jnp.fft.rfft2(x.astype(jnp.float32), norm="backward")    # (N,C,H,Wf)
    mag = jnp.abs(xf)
    safe = jnp.where(mag > 0.0, mag, 1.0)
    ure = jnp.where(mag > 0.0, jnp.real(xf) / safe, 1.0)          # cos(angle)
    uim = jnp.imag(xf) / safe                                     # sin(angle)

    mag_p = jnp.pad(mag, ((0, 0), (0, 0), (1, 2), (1, Wp - Wf - 1))
                    ).reshape(N, C, Lpad)
    ure_l = jnp.pad(ure, ((0, 0), (0, 0), (0, 0), (0, Wp - Wf))
                    ).reshape(N, C, Lo)
    uim_l = jnp.pad(uim, ((0, 0), (0, 0), (0, 0), (0, Wp - Wf))
                    ).reshape(N, C, Lo)

    # Per-grid-step VMEM estimate: double-buffered ins/outs + in-VMEM temps.
    freq_bytes = 4 * (2 * C * Lpad + 8 * C * Lo + C2 * Lpad
                      + 9 * C * Lo + 9 * C2 * Lo + 2 * C2 * Lo + 2 * C * Lo)
    freq_cost = pl.CostEstimate(
        flops=int(N * (2 * 9 * C * C2 * Lo * 2 + 8 * C2 * Lo + 6 * C * Lo)),
        transcendentals=0,
        bytes_accessed=int(4 * N * (C * Lpad + 4 * C * Lo)))

    # TODO(synk): for large images add an H row-tile grid axis (2-row halo)
    # and bf16 streaming of mag/ure/uim; at these shapes grid=(N,) suffices.
    real_l, imag_l = pl.pallas_call(
        functools.partial(_freq_kernel, H=H, Wf=Wf, Wp=Wp, Lpad=Lpad),
        out_shape=(jax.ShapeDtypeStruct((N, C, Lo), jnp.float32),
                   jax.ShapeDtypeStruct((N, C, Lo), jnp.float32)),
        grid=(N,),
        in_specs=[
            pl.BlockSpec((1, C, Lpad), lambda n: (n, 0, 0)),
            pl.BlockSpec((1, C, Lo), lambda n: (n, 0, 0)),
            pl.BlockSpec((1, C, Lo), lambda n: (n, 0, 0)),
            pl.BlockSpec((C2, 9 * C), lambda n: (0, 0)),
            pl.BlockSpec((C2, 1), lambda n: (0, 0)),
            pl.BlockSpec((C, 9 * C2), lambda n: (0, 0)),
            pl.BlockSpec((C, 1), lambda n: (0, 0)),
        ],
        out_specs=(pl.BlockSpec((1, C, Lo), lambda n: (n, 0, 0)),
                   pl.BlockSpec((1, C, Lo), lambda n: (n, 0, 0))),
        compiler_params=pltpu.CompilerParams(
            dimension_semantics=("parallel",),
            vmem_limit_bytes=_vmem_limit(freq_bytes)),
        cost_estimate=freq_cost,
    )(mag_p, ure_l, uim_l, params["w1"], params["b1"],
      params["w2"], params["b2"])

    real = real_l.reshape(N, C, H, Wp)[..., :Wf]
    imag = imag_l.reshape(N, C, H, Wp)[..., :Wf]
    x_out = jnp.fft.irfft2(lax.complex(real, imag), s=(H, W), norm="backward")

    # ---- residual gating + 1x1 conv: channel-major, lane-dense spatial ----
    S = H * W
    TS = min(_round_up(S, 128), 2048)
    Sp = _round_up(S, TS)
    pad_s = Sp - S
    x_flat = x.astype(jnp.float32).reshape(N, C, S)
    xo_flat = x_out.reshape(N, C, S)
    if pad_s:
        x_flat = jnp.pad(x_flat, ((0, 0), (0, 0), (0, pad_s)))
        xo_flat = jnp.pad(xo_flat, ((0, 0), (0, 0), (0, pad_s)))

    spatial_bytes = 4 * (6 * C * TS + C * C + 2 * C)
    spatial_cost = pl.CostEstimate(
        flops=int(2 * N * C * C * Sp + 4 * N * C * Sp),
        transcendentals=0,
        bytes_accessed=int(4 * N * C * Sp * 3))

    out_flat = pl.pallas_call(
        _spatial_kernel,
        out_shape=jax.ShapeDtypeStruct((N, C, Sp), jnp.float32),
        grid=(N, Sp // TS),
        in_specs=[
            pl.BlockSpec((1, C, TS), lambda n, s: (n, 0, s)),
            pl.BlockSpec((1, C, TS), lambda n, s: (n, 0, s)),
            pl.BlockSpec((C, 1), lambda n, s: (0, 0)),
            pl.BlockSpec((C, C), lambda n, s: (0, 0)),
            pl.BlockSpec((C, 1), lambda n, s: (0, 0)),
        ],
        out_specs=pl.BlockSpec((1, C, TS), lambda n, s: (n, 0, s)),
        compiler_params=pltpu.CompilerParams(
            dimension_semantics=("parallel", "parallel"),
            vmem_limit_bytes=_vmem_limit(spatial_bytes)),
        cost_estimate=spatial_cost,
    )(x_flat, xo_flat, params["gamma"], params["w_out"], params["b_out"])

    return out_flat[:, :, :S].reshape(N, C, H, W)


# ---------------------------------------------------------------------------
# Deterministic parameter init (shapes follow FreLayer.__init__ with nc, expand)
# ---------------------------------------------------------------------------
def init_params(key, nc, expand=2):
    c2 = expand * nc
    k1, k2, k3, k4, k5, k6 = jax.random.split(key, 6)
    # PyTorch layouts: conv weight (Cout, Cin, kh, kw), bias (Cout,)
    raw = dict(
        w1_t=0.1 * jax.random.normal(k1, (c2, nc, 3, 3), jnp.float32),
        b1_t=0.1 * jax.random.normal(k2, (c2,), jnp.float32),
        w2_t=0.1 * jax.random.normal(k3, (nc, c2, 3, 3), jnp.float32),
        b2_t=0.1 * jax.random.normal(k4, (nc,), jnp.float32),
        wo_t=0.1 * jax.random.normal(k5, (nc, nc, 1, 1), jnp.float32),
        bo_t=0.1 * jax.random.normal(k6, (nc,), jnp.float32),
        gamma=jnp.zeros((1, nc, 1, 1), jnp.float32),  # matches nn.Parameter(zeros)
    )
    # Tap-packed weights for the fused K = 9*Cin matmuls:
    #   (Cout, Cin, kh, kw) -> (Cout, kh*kw*Cin), column index = t*Cin + cin
    #   with t = dy*3 + dx, matching the in-kernel sublane stacking order.
    packed = dict(
        w1=jnp.transpose(raw["w1_t"], (0, 2, 3, 1)).reshape(c2, 9 * nc),
        b1=raw["b1_t"].reshape(c2, 1),
        w2=jnp.transpose(raw["w2_t"], (0, 2, 3, 1)).reshape(nc, 9 * c2),
        b2=raw["b2_t"].reshape(nc, 1),
        w_out=raw["wo_t"][:, :, 0, 0],               # (Cout, Cin)
        b_out=raw["bo_t"].reshape(nc, 1),
        gamma=raw["gamma"].reshape(nc, 1),
    )
    return raw, packed


# ---------------------------------------------------------------------------
# Plain-JAX reference (mirrors the PyTorch forward in NCHW) for a sanity check
# ---------------------------------------------------------------------------
def fre_layer_reference(x, w1_t, b1_t, w2_t, b2_t, wo_t, bo_t, gamma):
    res = x
    _, _, H, W = x.shape

    def conv(v, w, b, pad):
        out = lax.conv_general_dilated(
            v, w, (1, 1), [(pad, pad), (pad, pad)],
            dimension_numbers=("NCHW", "OIHW", "NCHW"))
        return out + b.reshape(1, -1, 1, 1)

    xf = jnp.fft.rfft2(x, norm="backward")
    mag, pha = jnp.abs(xf), jnp.angle(xf)
    m = conv(mag, w1_t, b1_t, 1)
    m = jnp.where(m >= 0.0, m, 0.1 * m)
    m = conv(m, w2_t, b2_t, 1)
    xo = jnp.fft.irfft2(lax.complex(m * jnp.cos(pha), m * jnp.sin(pha)),
                        s=(H, W), norm="backward")
    y = res + (res * xo) * gamma
    return conv(y, wo_t, bo_t, 0)


if __name__ == "__main__":
    key = jax.random.PRNGKey(0)
    nc, expand = 4, 2
    N, H, W = 2, 16, 16

    kx, kp, kg = jax.random.split(key, 3)
    x = jax.random.normal(kx, (N, nc, H, W), jnp.float32)
    raw, packed = init_params(kp, nc, expand)

    # gamma is zero-initialized in the module, which would make the whole
    # frequency branch a no-op in the output; use a non-zero gamma so the
    # conv/FFT path is actually exercised by the numerical check.
    gamma_test = 0.5 * jax.random.normal(kg, (1, nc, 1, 1), jnp.float32)
    raw["gamma"] = gamma_test
    packed["gamma"] = gamma_test.reshape(nc, 1)

    fwd = jax.jit(fre_layer_forward)
    out = jax.block_until_ready(fwd(x, packed))

    assert out.shape == (N, nc, H, W), out.shape

    ref = fre_layer_reference(x, **raw)
    max_err = float(jnp.max(jnp.abs(out - ref)))
    # MXU matmuls run at the default (bf16-decomposed) precision; parity with
    # the XLA conv reference is at the few-1e-4 level at these magnitudes.
    if not bool(jnp.allclose(out, ref, rtol=2e-3, atol=2e-3)):
        raise SystemExit(f"mismatch vs reference, max abs err = {max_err:g}")

    print("KERNEL_OK")
</pallas_src>

<mosaic_0001>
module attributes {stable_mosaic.version = 11 : i64} {
  func.func @_freq_kernel(%arg0: i32, %arg1: memref<1x4x304xf32, #tpu.memory_space<vmem>>, %arg2: memref<1x4x256xf32, #tpu.memory_space<vmem>>, %arg3: memref<1x4x256xf32, #tpu.memory_space<vmem>>, %arg4: memref<8x36xf32, #tpu.memory_space<vmem>>, %arg5: memref<8x1xf32, #tpu.memory_space<vmem>>, %arg6: memref<4x72xf32, #tpu.memory_space<vmem>>, %arg7: memref<4x1xf32, #tpu.memory_space<vmem>>, %arg8: memref<1x4x256xf32, #tpu.memory_space<vmem>>, %arg9: memref<1x4x256xf32, #tpu.memory_space<vmem>>) attributes {dimension_semantics = [#tpu.dimension_semantics<parallel>], iteration_bounds = array<i64: 2>, scalar_prefetch = 0 : i64, scratch_operands = 0 : i64, tpu.core_type = #tpu.core_type<tc>, window_params = [{transform_indices = @transform_0, window_bounds = array<i64: 1, 4, 304>}, {transform_indices = @transform_1, window_bounds = array<i64: 1, 4, 256>}, {transform_indices = @transform_2, window_bounds = array<i64: 1, 4, 256>}, {pipeline_mode = #tpu.pipeline_mode<synchronous>, transform_indices = @transform_3, window_bounds = array<i64: 8, 36>}, {pipeline_mode = #tpu.pipeline_mode<synchronous>, transform_indices = @transform_4, window_bounds = array<i64: 8, 1>}, {pipeline_mode = #tpu.pipeline_mode<synchronous>, transform_indices = @transform_5, window_bounds = array<i64: 4, 72>}, {pipeline_mode = #tpu.pipeline_mode<synchronous>, transform_indices = @transform_6, window_bounds = array<i64: 4, 1>}, {transform_indices = @transform_7, window_bounds = array<i64: 1, 4, 256>}, {transform_indices = @transform_8, window_bounds = array<i64: 1, 4, 256>}]} {
    %c0 = arith.constant 0 : index
    %c0_0 = arith.constant 0 : index
    %c0_1 = arith.constant 0 : index
    %0 = vector.load %arg1[%c0, %c0_0, %c0_1] : memref<1x4x304xf32, #tpu.memory_space<vmem>>, vector<1x4x304xf32>
    %1 = vector.shape_cast %0 : vector<1x4x304xf32> to vector<4x304xf32>
    %2 = vector.extract_strided_slice %1 {offsets = [0, 0], sizes = [4, 256], strides = [1, 1]} : vector<4x304xf32> to vector<4x256xf32>
    %3 = vector.extract_strided_slice %1 {offsets = [0, 1], sizes = [4, 256], strides = [1, 1]} : vector<4x304xf32> to vector<4x256xf32>
    %4 = vector.extract_strided_slice %1 {offsets = [0, 2], sizes = [4, 256], strides = [1, 1]} : vector<4x304xf32> to vector<4x256xf32>
    %5 = vector.extract_strided_slice %1 {offsets = [0, 16], sizes = [4, 256], strides = [1, 1]} : vector<4x304xf32> to vector<4x256xf32>
    %6 = vector.extract_strided_slice %1 {offsets = [0, 17], sizes = [4, 256], strides = [1, 1]} : vector<4x304xf32> to vector<4x256xf32>
    %7 = vector.extract_strided_slice %1 {offsets = [0, 18], sizes = [4, 256], strides = [1, 1]} : vector<4x304xf32> to vector<4x256xf32>
    %8 = vector.extract_strided_slice %1 {offsets = [0, 32], sizes = [4, 256], strides = [1, 1]} : vector<4x304xf32> to vector<4x256xf32>
    %9 = vector.extract_strided_slice %1 {offsets = [0, 33], sizes = [4, 256], strides = [1, 1]} : vector<4x304xf32> to vector<4x256xf32>
    %10 = vector.extract_strided_slice %1 {offsets = [0, 34], sizes = [4, 256], strides = [1, 1]} : vector<4x304xf32> to vector<4x256xf32>
    %11 = tpu.concatenate %2, %3, %4, %5, %6, %7, %8, %9, %10 in 0 : vector<4x256xf32>, vector<4x256xf32>, vector<4x256xf32>, vector<4x256xf32>, vector<4x256xf32>, vector<4x256xf32>, vector<4x256xf32>, vector<4x256xf32>, vector<4x256xf32> -> vector<36x256xf32>
    %c0_2 = arith.constant 0 : index
    %c0_3 = arith.constant 0 : index
    %12 = vector.load %arg4[%c0_2, %c0_3] : memref<8x36xf32, #tpu.memory_space<vmem>>, vector<8x36xf32>
    %cst = arith.constant dense<0.000000e+00> : vector<8x256xf32>
    %13 = tpu.matmul %12, %11, %cst {dimension_numbers = #tpu.dot_dimension_numbers<[1], [0], [0], [1], [0, 0, 1, 1], [], []>} : vector<8x36xf32>, vector<36x256xf32>, vector<8x256xf32> -> vector<8x256xf32>
    %c0_4 = arith.constant 0 : index
    %c0_5 = arith.constant 0 : index
    %14 = vector.load %arg5[%c0_4, %c0_5] : memref<8x1xf32, #tpu.memory_space<vmem>>, vector<8x1xf32>
    %15 = vector.broadcast %14 : vector<8x1xf32> to vector<8x256xf32>
    %16 = arith.addf %13, %15 : vector<8x256xf32>
    %cst_6 = arith.constant 1.000000e-01 : f32
    %17 = vector.broadcast %cst_6 : f32 to vector<8x256xf32>
    %18 = arith.mulf %17, %16 : vector<8x256xf32>
    %19 = arith.maximumf %16, %18 : vector<8x256xf32>
    %20 = tpu.iota {dimensions = array<i32: 1>} : vector<1x256xi32>
    %c16_i32 = arith.constant 16 : i32
    %c0_i32 = arith.constant 0 : i32
    %21 = arith.cmpi eq, %c16_i32, %c0_i32 : i32
    %c1_i32 = arith.constant 1 : i32
    %22 = arith.select %21, %c1_i32, %c16_i32 : i32
    %23 = vector.broadcast %22 : i32 to vector<1x256xi32>
    %24 = arith.remsi %20, %23 : vector<1x256xi32>
    %c0_i32_7 = arith.constant 0 : i32
    %25 = vector.broadcast %c0_i32_7 : i32 to vector<1x256xi32>
    %26 = arith.cmpi ne, %24, %25 : vector<1x256xi32>
    %c0_i32_8 = arith.constant 0 : i32
    %27 = vector.broadcast %c0_i32_8 : i32 to vector<1x256xi32>
    %28 = arith.cmpi slt, %24, %27 : vector<1x256xi32>
    %c0_i32_9 = arith.constant 0 : i32
    %29 = arith.cmpi slt, %22, %c0_i32_9 : i32
    %30 = vector.broadcast %29 : i1 to vector<1x256xi1>
    %31 = vector.broadcast %30 : vector<1x256xi1> to vector<1x256xi1>
    %32 = arith.xori %28, %31 : vector<1x256xi1>
    %33 = arith.andi %32, %26 : vector<1x256xi1>
    %34 = vector.broadcast %22 : i32 to vector<1x256xi32>
    %35 = arith.addi %24, %34 : vector<1x256xi32>
    %36 = arith.select %33, %35, %24 : vector<1x256xi1>, vector<1x256xi32>
    %c9_i32 = arith.constant 9 : i32
    %37 = vector.broadcast %c9_i32 : i32 to vector<1x256xi32>
    %38 = arith.cmpi slt, %36, %37 : vector<1x256xi32>
    %cst_10 = arith.constant 0.000000e+00 : f32
    %39 = vector.shape_cast %38 : vector<1x256xi1> to vector<1x256xi1>
    %40 = vector.broadcast %39 : vector<1x256xi1> to vector<8x256xi1>
    %41 = vector.broadcast %cst_10 : f32 to vector<8x256xf32>
    %42 = arith.select %40, %19, %41 : vector<8x256xi1>, vector<8x256xf32>
    %cst_11 = arith.constant 0.000000e+00 : f32
    %43 = vector.broadcast %cst_11 : f32 to vector<8x17xf32>
    %cst_12 = arith.constant 0.000000e+00 : f32
    %44 = vector.broadcast %cst_12 : f32 to vector<8x31xf32>
    %45 = tpu.concatenate %43, %42, %44 in 1 : vector<8x17xf32>, vector<8x256xf32>, vector<8x31xf32> -> vector<8x304xf32>
    %46 = vector.extract_strided_slice %45 {offsets = [0, 0], sizes = [8, 256], strides = [1, 1]} : vector<8x304xf32> to vector<8x256xf32>
    %47 = vector.extract_strided_slice %45 {offsets = [0, 1], sizes = [8, 256], strides = [1, 1]} : vector<8x304xf32> to vector<8x256xf32>
    %48 = vector.extract_strided_slice %45 {offsets = [0, 2], sizes = [8, 256], strides = [1, 1]} : vector<8x304xf32> to vector<8x256xf32>
    %49 = vector.extract_strided_slice %45 {offsets = [0, 16], sizes = [8, 256], strides = [1, 1]} : vector<8x304xf32> to vector<8x256xf32>
    %50 = vector.extract_strided_slice %45 {offsets = [0, 17], sizes = [8, 256], strides = [1, 1]} : vector<8x304xf32> to vector<8x256xf32>
    %51 = vector.extract_strided_slice %45 {offsets = [0, 18], sizes = [8, 256], strides = [1, 1]} : vector<8x304xf32> to vector<8x256xf32>
    %52 = vector.extract_strided_slice %45 {offsets = [0, 32], sizes = [8, 256], strides = [1, 1]} : vector<8x304xf32> to vector<8x256xf32>
    %53 = vector.extract_strided_slice %45 {offsets = [0, 33], sizes = [8, 256], strides = [1, 1]} : vector<8x304xf32> to vector<8x256xf32>
    %54 = vector.extract_strided_slice %45 {offsets = [0, 34], sizes = [8, 256], strides = [1, 1]} : vector<8x304xf32> to vector<8x256xf32>
    %55 = tpu.concatenate %46, %47, %48, %49, %50, %51, %52, %53, %54 in 0 : vector<8x256xf32>, vector<8x256xf32>, vector<8x256xf32>, vector<8x256xf32>, vector<8x256xf32>, vector<8x256xf32>, vector<8x256xf32>, vector<8x256xf32>, vector<8x256xf32> -> vector<72x256xf32>
    %c0_13 = arith.constant 0 : index
    %c0_14 = arith.constant 0 : index
    %56 = vector.load %arg6[%c0_13, %c0_14] : memref<4x72xf32, #tpu.memory_space<vmem>>, vector<4x72xf32>
    %cst_15 = arith.constant dense<0.000000e+00> : vector<4x256xf32>
    %57 = tpu.matmul %56, %55, %cst_15 {dimension_numbers = #tpu.dot_dimension_numbers<[1], [0], [0], [1], [0, 0, 1, 1], [], []>} : vector<4x72xf32>, vector<72x256xf32>, vector<4x256xf32> -> vector<4x256xf32>
    %c0_16 = arith.constant 0 : index
    %c0_17 = arith.constant 0 : index
    %58 = vector.load %arg7[%c0_16, %c0_17] : memref<4x1xf32, #tpu.memory_space<vmem>>, vector<4x1xf32>
    %59 = vector.broadcast %58 : vector<4x1xf32> to vector<4x256xf32>
    %60 = arith.addf %57, %59 : vector<4x256xf32>
    %c0_18 = arith.constant 0 : index
    %c0_19 = arith.constant 0 : index
    %c0_20 = arith.constant 0 : index
    %61 = vector.load %arg2[%c0_18, %c0_19, %c0_20] : memref<1x4x256xf32, #tpu.memory_space<vmem>>, vector<1x4x256xf32>
    %62 = vector.shape_cast %61 : vector<1x4x256xf32> to vector<4x256xf32>
    %63 = arith.mulf %60, %62 : vector<4x256xf32>
    %c0_21 = arith.constant 0 : index
    %c0_22 = arith.constant 0 : index
    %c0_23 = arith.constant 0 : index
    %64 = vector.load %arg8[%c0_21, %c0_22, %c0_23] : memref<1x4x256xf32, #tpu.memory_space<vmem>>, vector<1x4x256xf32>
    %65 = vector.shape_cast %64 : vector<1x4x256xf32> to vector<4x256xf32>
    %66 = vector.shape_cast %63 : vector<4x256xf32> to vector<1x4x256xf32>
    tpu.vector_store %arg8[%c0_21, %c0_22, %c0_23], %66 {strides = array<i32>} : memref<1x4x256xf32, #tpu.memory_space<vmem>>, vector<1x4x256xf32>,
    %c0_24 = arith.constant 0 : index
    %c0_25 = arith.constant 0 : index
    %c0_26 = arith.constant 0 : index
    %67 = vector.load %arg3[%c0_24, %c0_25, %c0_26] : memref<1x4x256xf32, #tpu.memory_space<vmem>>, vector<1x4x256xf32>
    %68 = vector.shape_cast %67 : vector<1x4x256xf32> to vector<4x256xf32>
    %69 = arith.mulf %60, %68 : vector<4x256xf32>
    %c0_27 = arith.constant 0 : index
    %c0_28 = arith.constant 0 : index
    %c0_29 = arith.constant 0 : index
    %70 = vector.load %arg9[%c0_27, %c0_28, %c0_29] : memref<1x4x256xf32, #tpu.memory_space<vmem>>, vector<1x4x256xf32>
    %71 = vector.shape_cast %70 : vector<1x4x256xf32> to vector<4x256xf32>
    %72 = vector.shape_cast %69 : vector<4x256xf32> to vector<1x4x256xf32>
    tpu.vector_store %arg9[%c0_27, %c0_28, %c0_29], %72 {strides = array<i32>} : memref<1x4x256xf32, #tpu.memory_space<vmem>>, vector<1x4x256xf32>,
    return
  }
  func.func @transform_0(%arg0: i32) -> (i32, i32, i32) {
    %c0_i32 = arith.constant 0 : i32
    %c0_i32_0 = arith.constant 0 : i32
    %c0_i32_1 = arith.constant 0 : i32
    return %arg0, %c0_i32, %c0_i32_0 : i32, i32, i32
  }
  func.func @transform_1(%arg0: i32) -> (i32, i32, i32) {
    %c0_i32 = arith.constant 0 : i32
    %c0_i32_0 = arith.constant 0 : i32
    %c0_i32_1 = arith.constant 0 : i32
    return %arg0, %c0_i32, %c0_i32_0 : i32, i32, i32
  }
  func.func @transform_2(%arg0: i32) -> (i32, i32, i32) {
    %c0_i32 = arith.constant 0 : i32
    %c0_i32_0 = arith.constant 0 : i32
    %c0_i32_1 = arith.constant 0 : i32
    return %arg0, %c0_i32, %c0_i32_0 : i32, i32, i32
  }
  func.func @transform_3(%arg0: i32) -> (i32, i32) {
    %c0_i32 = arith.constant 0 : i32
    %c0_i32_0 = arith.constant 0 : i32
    %c0_i32_1 = arith.constant 0 : i32
    return %c0_i32, %c0_i32_0 : i32, i32
  }
  func.func @transform_4(%arg0: i32) -> (i32, i32) {
    %c0_i32 = arith.constant 0 : i32
    %c0_i32_0 = arith.constant 0 : i32
    %c0_i32_1 = arith.constant 0 : i32
    return %c0_i32, %c0_i32_0 : i32, i32
  }
  func.func @transform_5(%arg0: i32) -> (i32, i32) {
    %c0_i32 = arith.constant 0 : i32
    %c0_i32_0 = arith.constant 0 : i32
    %c0_i32_1 = arith.constant 0 : i32
    return %c0_i32, %c0_i32_0 : i32, i32
  }
  func.func @transform_6(%arg0: i32) -> (i32, i32) {
    %c0_i32 = arith.constant 0 : i32
    %c0_i32_0 = arith.constant 0 : i32
    %c0_i32_1 = arith.constant 0 : i32
    return %c0_i32, %c0_i32_0 : i32, i32
  }
  func.func @transform_7(%arg0: i32) -> (i32, i32, i32) {
    %c0_i32 = arith.constant 0 : i32
    %c0_i32_0 = arith.constant 0 : i32
    %c0_i32_1 = arith.constant 0 : i32
    return %arg0, %c0_i32, %c0_i32_0 : i32, i32, i32
  }
  func.func @transform_8(%arg0: i32) -> (i32, i32, i32) {
    %c0_i32 = arith.constant 0 : i32
    %c0_i32_0 = arith.constant 0 : i32
    %c0_i32_1 = arith.constant 0 : i32
    return %arg0, %c0_i32, %c0_i32_0 : i32, i32, i32
  }
}

module attributes {stable_mosaic.version = 11 : i64} {
  func.func @_spatial_kernel(%arg0: i32, %arg1: i32, %arg2: memref<1x4x256xf32, #tpu.memory_space<vmem>>, %arg3: memref<1x4x256xf32, #tpu.memory_space<vmem>>, %arg4: memref<4x1xf32, #tpu.memory_space<vmem>>, %arg5: memref<4x4xf32, #tpu.memory_space<vmem>>, %arg6: memref<4x1xf32, #tpu.memory_space<vmem>>, %arg7: memref<1x4x256xf32, #tpu.memory_space<vmem>>) attributes {dimension_semantics = [#tpu.dimension_semantics<parallel>, #tpu.dimension_semantics<parallel>], iteration_bounds = array<i64: 2, 1>, scalar_prefetch = 0 : i64, scratch_operands = 0 : i64, tpu.core_type = #tpu.core_type<tc>, window_params = [{transform_indices = @transform_0, window_bounds = array<i64: 1, 4, 256>}, {transform_indices = @transform_1, window_bounds = array<i64: 1, 4, 256>}, {pipeline_mode = #tpu.pipeline_mode<synchronous>, transform_indices = @transform_2, window_bounds = array<i64: 4, 1>}, {pipeline_mode = #tpu.pipeline_mode<synchronous>, transform_indices = @transform_3, window_bounds = array<i64: 4, 4>}, {pipeline_mode = #tpu.pipeline_mode<synchronous>, transform_indices = @transform_4, window_bounds = array<i64: 4, 1>}, {transform_indices = @transform_5, window_bounds = array<i64: 1, 4, 256>}]} {
    %c0 = arith.constant 0 : index
    %c0_0 = arith.constant 0 : index
    %c0_1 = arith.constant 0 : index
    %0 = vector.load %arg2[%c0, %c0_0, %c0_1] : memref<1x4x256xf32, #tpu.memory_space<vmem>>, vector<1x4x256xf32>
    %1 = vector.shape_cast %0 : vector<1x4x256xf32> to vector<4x256xf32>
    %c0_2 = arith.constant 0 : index
    %c0_3 = arith.constant 0 : index
    %c0_4 = arith.constant 0 : index
    %2 = vector.load %arg3[%c0_2, %c0_3, %c0_4] : memref<1x4x256xf32, #tpu.memory_space<vmem>>, vector<1x4x256xf32>
    %3 = vector.shape_cast %2 : vector<1x4x256xf32> to vector<4x256xf32>
    %4 = arith.mulf %1, %3 : vector<4x256xf32>
    %c0_5 = arith.constant 0 : index
    %c0_6 = arith.constant 0 : index
    %5 = vector.load %arg4[%c0_5, %c0_6] : memref<4x1xf32, #tpu.memory_space<vmem>>, vector<4x1xf32>
    %6 = vector.broadcast %5 : vector<4x1xf32> to vector<4x256xf32>
    %7 = arith.mulf %4, %6 : vector<4x256xf32>
    %8 = arith.addf %1, %7 : vector<4x256xf32>
    %c0_7 = arith.constant 0 : index
    %c0_8 = arith.constant 0 : index
    %9 = vector.load %arg5[%c0_7, %c0_8] : memref<4x4xf32, #tpu.memory_space<vmem>>, vector<4x4xf32>
    %cst = arith.constant dense<0.000000e+00> : vector<4x256xf32>
    %10 = tpu.matmul %9, %8, %cst {dimension_numbers = #tpu.dot_dimension_numbers<[1], [0], [0], [1], [0, 0, 1, 1], [], []>} : vector<4x4xf32>, vector<4x256xf32>, vector<4x256xf32> -> vector<4x256xf32>
    %c0_9 = arith.constant 0 : index
    %c0_10 = arith.constant 0 : index
    %11 = vector.load %arg6[%c0_9, %c0_10] : memref<4x1xf32, #tpu.memory_space<vmem>>, vector<4x1xf32>
    %12 = vector.broadcast %11 : vector<4x1xf32> to vector<4x256xf32>
    %13 = arith.addf %10, %12 : vector<4x256xf32>
    %c0_11 = arith.constant 0 : index
    %c0_12 = arith.constant 0 : index
    %c0_13 = arith.constant 0 : index
    %14 = vector.load %arg7[%c0_11, %c0_12, %c0_13] : memref<1x4x256xf32, #tpu.memory_space<vmem>>, vector<1x4x256xf32>
    %15 = vector.shape_cast %14 : vector<1x4x256xf32> to vector<4x256xf32>
    %16 = vector.shape_cast %13 : vector<4x256xf32> to vector<1x4x256xf32>
    tpu.vector_store %arg7[%c0_11, %c0_12, %c0_13], %16 {strides = array<i32>} : memref<1x4x256xf32, #tpu.memory_space<vmem>>, vector<1x4x256xf32>,
    return
  }
  func.func @transform_0(%arg0: i32, %arg1: i32) -> (i32, i32, i32) {
    %c0_i32 = arith.constant 0 : i32
    %c0_i32_0 = arith.constant 0 : i32
    return %arg0, %c0_i32, %arg1 : i32, i32, i32
  }
  func.func @transform_1(%arg0: i32, %arg1: i32) -> (i32, i32, i32) {
    %c0_i32 = arith.constant 0 : i32
    %c0_i32_0 = arith.constant 0 : i32
    return %arg0, %c0_i32, %arg1 : i32, i32, i32
  }
  func.func @transform_2(%arg0: i32, %arg1: i32) -> (i32, i32) {
    %c0_i32 = arith.constant 0 : i32
    %c0_i32_0 = arith.constant 0 : i32
    %c0_i32_1 = arith.constant 0 : i32
    return %c0_i32, %c0_i32_0 : i32, i32
  }
  func.func @transform_3(%arg0: i32, %arg1: i32) -> (i32, i32) {
    %c0_i32 = arith.constant 0 : i32
    %c0_i32_0 = arith.constant 0 : i32
    %c0_i32_1 = arith.constant 0 : i32
    return %c0_i32, %c0_i32_0 : i32, i32
  }
  func.func @transform_4(%arg0: i32, %arg1: i32) -> (i32, i32) {
    %c0_i32 = arith.constant 0 : i32
    %c0_i32_0 = arith.constant 0 : i32
    %c0_i32_1 = arith.constant 0 : i32
    return %c0_i32, %c0_i32_0 : i32, i32
  }
  func.func @transform_5(%arg0: i32, %arg1: i32) -> (i32, i32, i32) {
    %c0_i32 = arith.constant 0 : i32
    %c0_i32_0 = arith.constant 0 : i32
    return %arg0, %c0_i32, %arg1 : i32, i32, i32
  }
}

</mosaic_0001>

<llo_original>
// kernel: reverse.0
$region0: #{reverse.0}
  %s0 = inlined_call_operand.vmem [shape: f32[2,4,16,7], index: 0, kind: input, shape index: {}]
  %s1 = inlined_call_operand.vmem [shape: f32[2,4,16,7], index: 1, kind: output, shape index: {}]
  $region1: #{reverse.0} parent=0
    #allocation0 [shape = 'u8[65536]{0}', space=vmem, size = 0x10000, scoped, tag = 'operand span for operand 0']
    #allocation1 [shape = 'u8[32768]{0}', space=vmem, size = 0x8000, scoped, tag = 'operand span for operand 1']
    %s2 = scalar_lea.vmem [#allocation0], 8
    // Predicated region
    $region2: #{reverse.0} parent=1 // pred_check
      _
    $region3: #{reverse.0} parent=1 // pred_check_branch
      %4 = sbr.rel (0) target = $region5
    $region4: #{reverse.0} parent=1 // pred_region
      // Predicated region
      $region6: #{reverse.0} parent=4 // pred_check
        _
      $region7: #{reverse.0} parent=4 // pred_check_branch
        %6 = sbr.rel (0) target = $region9
      $region8: #{reverse.0} parent=4 // pred_region
        // Predicated region
        $region21: #{reverse.0} parent=8 // pred_check
          _
        $region22: #{reverse.0} parent=8 // pred_check_branch
          %36 = sbr.rel (0) target = $region24
        $region23: #{reverse.0} parent=8 // pred_region
          loop: start=0, step=1, limit=1
          $region25: #{reverse.0} parent=23 // loop_pre_header
            _
          $region26: #{reverse.0} parent=23 // loop_header
            %s38 = sphi 0, %s42
            %p39 = scmp.ge.s32.totalorder %s38, 1
            %s43 = sphi %s0, %s0
            %s44 = sphi %s2, %s2
          $region27: #{reverse.0} parent=23 // loop_header_branch
            %41 = sbr.rel (%p39) target = $region31
          $region28: #{reverse.0} parent=23 // loop_body
            %v45 = vld [vmem:[%s43] sm:$0xff]
            %46 = vst [vmem:[%s44] sm:$0xff] %v45
            %v47 = vld [vmem:[%s43 + $0x8] sm:$0xff]
            %48 = vst [vmem:[%s44 + $0x10] sm:$0xff] %v47
            %v49 = vld [vmem:[%s43 + $0x10] sm:$0xff]
            %50 = vst [vmem:[%s44 + $0x20] sm:$0xff] %v49
            %v51 = vld [vmem:[%s43 + $0x18] sm:$0xff]
            %52 = vst [vmem:[%s44 + $0x30] sm:$0xff] %v51
            %v53 = vld [vmem:[%s43 + $0x20] sm:$0xff]
            %54 = vst [vmem:[%s44 + $0x40] sm:$0xff] %v53
            %v55 = vld [vmem:[%s43 + $0x28] sm:$0xff]
            %56 = vst [vmem:[%s44 + $0x50] sm:$0xff] %v55
            %v57 = vld [vmem:[%s43 + $0x30] sm:$0xff]
            %58 = vst [vmem:[%s44 + $0x60] sm:$0xff] %v57
            %v59 = vld [vmem:[%s43 + $0x38] sm:$0xff]
            %60 = vst [vmem:[%s44 + $0x70] sm:$0xff] %v59
          $region29: #{reverse.0} parent=23 // loop_footer
            %s42 = sadd.s32 1, %s38
          $region30: #{reverse.0} parent=23 // loop_footer_branch
            %37 = sbr.rel target = $region26
          $region31: #{reverse.0} parent=23 // loop_exit
            _
        $region24: #{reverse.0} parent=8 // pred_fallthru
          _
        // Predicated region
        $region32: #{reverse.0} parent=8 // pred_check
          _
        $region33: #{reverse.0} parent=8 // pred_check_branch
          %62 = sbr.rel target = $region35
        $region34: #{reverse.0} parent=8 // pred_region
          _
        $region35: #{reverse.0} parent=8 // pred_fallthru
          _
      $region9: #{reverse.0} parent=4 // pred_fallthru
        _
      // Predicated region
      $region10: #{reverse.0} parent=4 // pred_check
        _
      $region11: #{reverse.0} parent=4 // pred_check_branch
        %8 = sbr.rel target = $region13
      $region12: #{reverse.0} parent=4 // pred_region
        %s10 = ssub.s32 256, 1
        loop: start=0, step=1, limit=1
        $region14: #{reverse.0} parent=12 // loop_pre_header
          _
        $region15: #{reverse.0} parent=12 // loop_header
          %s12 = sphi 0, %s16
          %p13 = scmp.ge.s32.totalorder %s12, 1
          %s17 = sphi %s0, %s0
          %s18 = sphi %s2, %s2
        $region16: #{reverse.0} parent=12 // loop_header_branch
          %15 = sbr.rel (%p13) target = $region20
        $region17: #{reverse.0} parent=12 // loop_body
          %v19 = vld [vmem:[%s17] sm:%s10]
          %20 = vst [vmem:[%s18] sm:%s10] %v19
          %v21 = vld [vmem:[%s17 + $0x8] sm:%s10]
          %22 = vst [vmem:[%s18 + $0x10] sm:%s10] %v21
          %v23 = vld [vmem:[%s17 + $0x10] sm:%s10]
          %24 = vst [vmem:[%s18 + $0x20] sm:%s10] %v23
          %v25 = vld [vmem:[%s17 + $0x18] sm:%s10]
          %26 = vst [vmem:[%s18 + $0x30] sm:%s10] %v25
          %v27 = vld [vmem:[%s17 + $0x20] sm:%s10]
          %28 = vst [vmem:[%s18 + $0x40] sm:%s10] %v27
          %v29 = vld [vmem:[%s17 + $0x28] sm:%s10]
          %30 = vst [vmem:[%s18 + $0x50] sm:%s10] %v29
          %v31 = vld [vmem:[%s17 + $0x30] sm:%s10]
          %32 = vst [vmem:[%s18 + $0x60] sm:%s10] %v31
          %v33 = vld [vmem:[%s17 + $0x38] sm:%s10]
          %34 = vst [vmem:[%s18 + $0x70] sm:%s10] %v33
        $region18: #{reverse.0} parent=12 // loop_footer
          %s16 = sadd.s32 1, %s12
        $region19: #{reverse.0} parent=12 // loop_footer_branch
          %11 = sbr.rel target = $region15
        $region20: #{reverse.0} parent=12 // loop_exit
          _
      $region13: #{reverse.0} parent=4 // pred_fallthru
        _
    $region5: #{reverse.0} parent=1 // pred_fallthru
      _
    %63 = vnop
    %s64 = scalar_lea.vmem [#allocation0], 7
    %v65 = vld [vmem:[%s64] ss:$-1 sm:$0xff]
    %v66 = vrot.slane %v65, 1
    %67 = vst [vmem:[#allocation1] sm:$0xff] %v66
    %s68 = scalar_lea.vmem [#allocation0], 8
    %s69 = scalar_lea.vmem %s68, 7 [#allocation0]
    %v70 = vld [vmem:[%s69] ss:$-1 sm:$0xff]
    %v71 = vrot.slane %v70, 1
    %v72 = vlaneseq
    %v73 = vshrl.u32 %v72, 7
    %vm74 = vcmp.lt.s32.totalorder %v73, 7
    %75 = vst.msk [vmem:[#allocation1] sm:$0xff] %vm74, %v71
    %s76 = scalar_lea.vmem [#allocation1], 8
    %s77 = scalar_lea.vmem [#allocation0], 16
    %s78 = scalar_lea.vmem %s77, 7 [#allocation0]
    %v79 = vld [vmem:[%s78] ss:$-1 sm:$0xff]
    %v80 = vrot.slane %v79, 1
    %81 = vst [vmem:[%s76] sm:$0xff] %v80
    %s82 = scalar_lea.vmem %s77, 8 [#allocation0]
    %s83 = scalar_lea.vmem %s82, 7 [#allocation0]
    %v84 = vld [vmem:[%s83] ss:$-1 sm:$0xff]
    %v85 = vrot.slane %v84, 1
    %v86 = vlaneseq
    %v87 = vshrl.u32 %v86, 7
    %vm88 = vcmp.lt.s32.totalorder %v87, 7
    %89 = vst.msk [vmem:[%s76] sm:$0xff] %vm88, %v85
    %s90 = scalar_lea.vmem [#allocation1], 16
    %s91 = scalar_lea.vmem [#allocation0], 32
    %s92 = scalar_lea.vmem %s91, 7 [#allocation0]
    %v93 = vld [vmem:[%s92] ss:$-1 sm:$0xff]
    %v94 = vrot.slane %v93, 1
    %95 = vst [vmem:[%s90] sm:$0xff] %v94
    %s96 = scalar_lea.vmem %s91, 8 [#allocation0]
    %s97 = scalar_lea.vmem %s96, 7 [#allocation0]
    %v98 = vld [vmem:[%s97] ss:$-1 sm:$0xff]
    %v99 = vrot.slane %v98, 1
    %v100 = vlaneseq
    %v101 = vshrl.u32 %v100, 7
    %vm102 = vcmp.lt.s32.totalorder %v101, 7
    %103 = vst.msk [vmem:[%s90] sm:$0xff] %vm102, %v99
    %s104 = scalar_lea.vmem [#allocation1], 24
    %s105 = scalar_lea.vmem [#allocation0], 48
    %s106 = scalar_lea.vmem %s105, 7 [#allocation0]
    %v107 = vld [vmem:[%s106] ss:$-1 sm:$0xff]
    %v108 = vrot.slane %v107, 1
    %109 = vst [vmem:[%s104] sm:$0xff] %v108
    %s110 = scalar_lea.vmem %s105, 8 [#allocation0]
    %s111 = scalar_lea.vmem %s110, 7 [#allocation0]
    %v112 = vld [vmem:[%s111] ss:$-1 sm:$0xff]
    %v113 = vrot.slane %v112, 1
    %v114 = vlaneseq
    %v115 = vshrl.u32 %v114, 7
    %vm116 = vcmp.lt.s32.totalorder %v115, 7
    %117 = vst.msk [vmem:[%s104] sm:$0xff] %vm116, %v113
    %s118 = scalar_lea.vmem [#allocation1], 32
    %s119 = scalar_lea.vmem [#allocation0], 64
    %s120 = scalar_lea.vmem %s119, 7 [#allocation0]
    %v121 = vld [vmem:[%s120] ss:$-1 sm:$0xff]
    %v122 = vrot.slane %v121, 1
    %123 = vst [vmem:[%s118] sm:$0xff] %v122
    %s124 = scalar_lea.vmem %s119, 8 [#allocation0]
    %s125 = scalar_lea.vmem %s124, 7 [#allocation0]
    %v126 = vld [vmem:[%s125] ss:$-1 sm:$0xff]
    %v127 = vrot.slane %v126, 1
    %v128 = vlaneseq
    %v129 = vshrl.u32 %v128, 7
    %vm130 = vcmp.lt.s32.totalorder %v129, 7
    %131 = vst.msk [vmem:[%s118] sm:$0xff] %vm130, %v127
    %s132 = scalar_lea.vmem [#allocation1], 40
    %s133 = scalar_lea.vmem [#allocation0], 80
    %s134 = scalar_lea.vmem %s133, 7 [#allocation0]
    %v135 = vld [vmem:[%s134] ss:$-1 sm:$0xff]
    %v136 = vrot.slane %v135, 1
    %137 = vst [vmem:[%s132] sm:$0xff] %v136
    %s138 = scalar_lea.vmem %s133, 8 [#allocation0]
    %s139 = scalar_lea.vmem %s138, 7 [#allocation0]
    %v140 = vld [vmem:[%s139] ss:$-1 sm:$0xff]
    %v141 = vrot.slane %v140, 1
    %v142 = vlaneseq
    %v143 = vshrl.u32 %v142, 7
    %vm144 = vcmp.lt.s32.totalorder %v143, 7
    %145 = vst.msk [vmem:[%s132] sm:$0xff] %vm144, %v141
    %s146 = scalar_lea.vmem [#allocation1], 48
    %s147 = scalar_lea.vmem [#allocation0], 96
    %s148 = scalar_lea.vmem %s147, 7 [#allocation0]
    %v149 = vld [vmem:[%s148] ss:$-1 sm:$0xff]
    %v150 = vrot.slane %v149, 1
    %151 = vst [vmem:[%s146] sm:$0xff] %v150
    %s152 = scalar_lea.vmem %s147, 8 [#allocation0]
    %s153 = scalar_lea.vmem %s152, 7 [#allocation0]
    %v154 = vld [vmem:[%s153] ss:$-1 sm:$0xff]
    %v155 = vrot.slane %v154, 1
    %v156 = vlaneseq
    %v157 = vshrl.u32 %v156, 7
    %vm158 = vcmp.lt.s32.totalorder %v157, 7
    %159 = vst.msk [vmem:[%s146] sm:$0xff] %vm158, %v155
    %s160 = scalar_lea.vmem [#allocation1], 56
    %s161 = scalar_lea.vmem [#allocation0], 112
    %s162 = scalar_lea.vmem %s161, 7 [#allocation0]
    %v163 = vld [vmem:[%s162] ss:$-1 sm:$0xff]
    %v164 = vrot.slane %v163, 1
    %165 = vst [vmem:[%s160] sm:$0xff] %v164
    %s166 = scalar_lea.vmem %s161, 8 [#allocation0]
    %s167 = scalar_lea.vmem %s166, 7 [#allocation0]
    %v168 = vld [vmem:[%s167] ss:$-1 sm:$0xff]
    %v169 = vrot.slane %v168, 1
    %v170 = vlaneseq
    %v171 = vshrl.u32 %v170, 7
    %vm172 = vcmp.lt.s32.totalorder %v171, 7
    %173 = vst.msk [vmem:[%s160] sm:$0xff] %vm172, %v169
    // Predicated region
    $region36: #{reverse.0} parent=1 // pred_check
      _
    $region37: #{reverse.0} parent=1 // pred_check_branch
      %175 = sbr.rel (0) target = $region39
    $region38: #{reverse.0} parent=1 // pred_region
      // Predicated region
      $region40: #{reverse.0} parent=38 // pred_check
        _
      $region41: #{reverse.0} parent=38 // pred_check_branch
        %177 = sbr.rel (0) target = $region43
      $region42: #{reverse.0} parent=38 // pred_region
        // Predicated region
        $region55: #{reverse.0} parent=42 // pred_check
          _
        $region56: #{reverse.0} parent=42 // pred_check_branch
          %207 = sbr.rel (0) target = $region58
        $region57: #{reverse.0} parent=42 // pred_region
          loop: start=0, step=1, limit=1
          $region59: #{reverse.0} parent=57 // loop_pre_header
            _
          $region60: #{reverse.0} parent=57 // loop_header
            %s209 = sphi 0, %s213
            %p210 = scmp.ge.s32.totalorder %s209, 1
            %s214 = sphi [#allocation1], [#allocation1]
            %s215 = sphi %s1, %s1
          $region61: #{reverse.0} parent=57 // loop_header_branch
            %212 = sbr.rel (%p210) target = $region65
          $region62: #{reverse.0} parent=57 // loop_body
            %v216 = vld [vmem:[%s214] sm:$0xff]
            %217 = vst [vmem:[%s215] sm:$0xff] %v216
            %v218 = vld [vmem:[%s214 + $0x8] sm:$0xff]
            %219 = vst [vmem:[%s215 + $0x8] sm:$0xff] %v218
            %v220 = vld [vmem:[%s214 + $0x10] sm:$0xff]
            %221 = vst [vmem:[%s215 + $0x10] sm:$0xff] %v220
            %v222 = vld [vmem:[%s214 + $0x18] sm:$0xff]
            %223 = vst [vmem:[%s215 + $0x18] sm:$0xff] %v222
            %v224 = vld [vmem:[%s214 + $0x20] sm:$0xff]
            %225 = vst [vmem:[%s215 + $0x20] sm:$0xff] %v224
            %v226 = vld [vmem:[%s214 + $0x28] sm:$0xff]
            %227 = vst [vmem:[%s215 + $0x28] sm:$0xff] %v226
            %v228 = vld [vmem:[%s214 + $0x30] sm:$0xff]
            %229 = vst [vmem:[%s215 + $0x30] sm:$0xff] %v228
            %v230 = vld [vmem:[%s214 + $0x38] sm:$0xff]
            %231 = vst [vmem:[%s215 + $0x38] sm:$0xff] %v230
          $region63: #{reverse.0} parent=57 // loop_footer
            %s213 = sadd.s32 1, %s209
          $region64: #{reverse.0} parent=57 // loop_footer_branch
            %208 = sbr.rel target = $region60
          $region65: #{reverse.0} parent=57 // loop_exit
            _
        $region58: #{reverse.0} parent=42 // pred_fallthru
          _
        // Predicated region
        $region66: #{reverse.0} parent=42 // pred_check
          _
        $region67: #{reverse.0} parent=42 // pred_check_branch
          %233 = sbr.rel target = $region69
        $region68: #{reverse.0} parent=42 // pred_region
          _
        $region69: #{reverse.0} parent=42 // pred_fallthru
          _
      $region43: #{reverse.0} parent=38 // pred_fallthru
        _
      // Predicated region
      $region44: #{reverse.0} parent=38 // pred_check
        _
      $region45: #{reverse.0} parent=38 // pred_check_branch
        %179 = sbr.rel target = $region47
      $region46: #{reverse.0} parent=38 // pred_region
        %s181 = ssub.s32 256, 1
        loop: start=0, step=1, limit=1
        $region48: #{reverse.0} parent=46 // loop_pre_header
          _
        $region49: #{reverse.0} parent=46 // loop_header
          %s183 = sphi 0, %s187
          %p184 = scmp.ge.s32.totalorder %s183, 1
          %s188 = sphi [#allocation1], [#allocation1]
          %s189 = sphi %s1, %s1
        $region50: #{reverse.0} parent=46 // loop_header_branch
          %186 = sbr.rel (%p184) target = $region54
        $region51: #{reverse.0} parent=46 // loop_body
          %v190 = vld [vmem:[%s188] sm:%s181]
          %191 = vst [vmem:[%s189] sm:%s181] %v190
          %v192 = vld [vmem:[%s188 + $0x8] sm:%s181]
          %193 = vst [vmem:[%s189 + $0x8] sm:%s181] %v192
          %v194 = vld [vmem:[%s188 + $0x10] sm:%s181]
          %195 = vst [vmem:[%s189 + $0x10] sm:%s181] %v194
          %v196 = vld [vmem:[%s188 + $0x18] sm:%s181]
          %197 = vst [vmem:[%s189 + $0x18] sm:%s181] %v196
          %v198 = vld [vmem:[%s188 + $0x20] sm:%s181]
          %199 = vst [vmem:[%s189 + $0x20] sm:%s181] %v198
          %v200 = vld [vmem:[%s188 + $0x28] sm:%s181]
          %201 = vst [vmem:[%s189 + $0x28] sm:%s181] %v200
          %v202 = vld [vmem:[%s188 + $0x30] sm:%s181]
          %203 = vst [vmem:[%s189 + $0x30] sm:%s181] %v202
          %v204 = vld [vmem:[%s188 + $0x38] sm:%s181]
          %205 = vst [vmem:[%s189 + $0x38] sm:%s181] %v204
        $region52: #{reverse.0} parent=46 // loop_footer
          %s187 = sadd.s32 1, %s183
        $region53: #{reverse.0} parent=46 // loop_footer_branch
          %182 = sbr.rel target = $region49
        $region54: #{reverse.0} parent=46 // loop_exit
          _
      $region47: #{reverse.0} parent=38 // pred_fallthru
        _
    $region39: #{reverse.0} parent=1 // pred_fallthru
      _
    %234 = vnop

// kernel: fre_layer_forward.2
$region0: #{fre_layer_forward.2}
  #allocation0 [shape = 'u32[]', space=smem, size = 0x4, offset = 0x4, fixed_abs, tag = 'smem constant byte address 0x4 - core index']
  #allocation1 [shape = 'u32[72,128]{1,0:T(1,128)}', space=vmem, size = 0x9000, scoped, tag = 'internal scratch']
  %s0 = inlined_call_operand.vmem [shape: f32[2,4,304], index: 0, kind: input, shape index: {}]
  %s1 = inlined_call_operand.vmem [shape: f32[2,4,256], index: 1, kind: input, shape index: {}]
  %s2 = inlined_call_operand.vmem [shape: f32[2,4,256], index: 2, kind: input, shape index: {}]
  %s3 = inlined_call_operand.vmem [shape: f32[8,36], index: 3, kind: input, shape index: {}]
  %s4 = inlined_call_operand.vmem [shape: f32[8,1], index: 4, kind: input, shape index: {}]
  %s5 = inlined_call_operand.vmem [shape: f32[4,72], index: 5, kind: input, shape index: {}]
  %s6 = inlined_call_operand.vmem [shape: f32[4,1], index: 6, kind: input, shape index: {}]
  %s7 = inlined_call_operand.vmem [shape: f32[2,4,256], index: 7, kind: output, shape index: {0}]
  %s8 = inlined_call_operand.vmem [shape: f32[2,4,256], index: 8, kind: output, shape index: {1}]
  %9 = xla_tuple %s7, %s8
  %s10 = sld [smem:[#allocation0]]
  $region69: #{fre_layer_forward.2} parent=0
    _
  %s12 = ssub.s32 1, %s10
  %s13 = scalar_select 0, %s12, %s10
  loop: start=0, step=1, limit=4
  $region2: #{fre_layer_forward.2} parent=0 // loop_pre_header
    _
  $region3: #{fre_layer_forward.2} parent=0 // loop_header
    %s15 = sphi 0, %s19
    %p16 = scmp.ge.s32.totalorder %s15, 4
    %s25 = sphi 0, %s27
    %s28 = sphi 0, %s25
    %s29 = sphi 0, %s28
    %s45 = sphi 0, %s29
    %s51 = sphi 0, %s53
    %s54 = sphi 0, %s51
    %s55 = sphi 0, %s54
    %s71 = sphi 0, %s55
    %s77 = sphi 0, %s79
    %s80 = sphi 0, %s77
    %s81 = sphi 0, %s80
    %s97 = sphi 0, %s81
    %s101 = sphi 0, %s101
    %s103 = sphi 0, %s101
    %s104 = sphi 0, %s103
    %s118 = sphi 0, %s104
    %s122 = sphi 0, %s122
    %s124 = sphi 0, %s122
    %s125 = sphi 0, %s124
    %s139 = sphi 0, %s125
    %s143 = sphi 0, %s143
    %s145 = sphi 0, %s143
    %s146 = sphi 0, %s145
    %s160 = sphi 0, %s146
    %s164 = sphi 0, %s164
    %s166 = sphi 0, %s164
    %s167 = sphi 0, %s166
    %s181 = sphi 0, %s167
    %s187 = sphi 0, %s189
    %s190 = sphi 0, %s187
    %s191 = sphi 0, %s190
    %s207 = sphi 0, %s191
    %s213 = sphi 0, %s215
    %s216 = sphi 0, %s213
    %s217 = sphi 0, %s216
    %s233 = sphi 0, %s217
  $region4: #{fre_layer_forward.2} parent=0 // loop_header_branch
    %18 = sbr.rel (%p16) target = $region8
  $region5: #{fre_layer_forward.2} parent=0 // loop_body
    %s20 = ssub.s32 %s15, 1
    %s21 = ssub.s32 %s15, 2
    %s22 = sadd.s32 %s15, 1
    %s23 = ssub.s32 %s15, %s22
    %p24 = scmp.eq.s32.totalorder %s23, 0
    %s26 = sadd.s32 %s25, 1
    %s27 = scalar_select %p24, %s25, %s26
    %p30 = pneg %p24
    %p31 = scmp.eq.s32.totalorder %s15, 1
    %p32 = por %p30, %p31
    %p33 = scmp.ne.s32.totalorder %s25, %s28
    %p34 = scmp.eq.s32.totalorder %s15, 0
    %p35 = por %p33, %p34
    %p36 = scmp.ne.s32.totalorder %s25, %s28
    %p37 = scmp.eq.s32.totalorder %s20, 1
    %p38 = por %p36, %p37
    %p39 = scmp.ne.s32.totalorder %s28, %s29
    %p40 = scmp.eq.s32.totalorder %s20, 0
    %p41 = por %p39, %p40
    %p42 = scmp.ne.s32.totalorder %s28, %s29
    %p43 = scmp.eq.s32.totalorder %s21, 1
    %p44 = por %p42, %p43
    %p46 = scmp.ne.s32.totalorder %s29, %s45
    %p47 = scmp.eq.s32.totalorder %s21, 0
    %p48 = por %p46, %p47
    %s49 = ssub.s32 %s15, %s22
    %p50 = scmp.eq.s32.totalorder %s49, 0
    %s52 = sadd.s32 %s51, 1
    %s53 = scalar_select %p50, %s51, %s52
    %p56 = pneg %p50
    %p57 = scmp.eq.s32.totalorder %s15, 1
    %p58 = por %p56, %p57
    %p59 = scmp.ne.s32.totalorder %s51, %s54
    %p60 = scmp.eq.s32.totalorder %s15, 0
    %p61 = por %p59, %p60
    %p62 = scmp.ne.s32.totalorder %s51, %s54
    %p63 = scmp.eq.s32.totalorder %s20, 1
    %p64 = por %p62, %p63
    %p65 = scmp.ne.s32.totalorder %s54, %s55
    %p66 = scmp.eq.s32.totalorder %s20, 0
    %p67 = por %p65, %p66
    %p68 = scmp.ne.s32.totalorder %s54, %s55
    %p69 = scmp.eq.s32.totalorder %s21, 1
    %p70 = por %p68, %p69
    %p72 = scmp.ne.s32.totalorder %s55, %s71
    %p73 = scmp.eq.s32.totalorder %s21, 0
    %p74 = por %p72, %p73
    %s75 = ssub.s32 %s15, %s22
    %p76 = scmp.eq.s32.totalorder %s75, 0
    %s78 = sadd.s32 %s77, 1
    %s79 = scalar_select %p76, %s77, %s78
    %p82 = pneg %p76
    %p83 = scmp.eq.s32.totalorder %s15, 1
    %p84 = por %p82, %p83
    %p85 = scmp.ne.s32.totalorder %s77, %s80
    %p86 = scmp.eq.s32.totalorder %s15, 0
    %p87 = por %p85, %p86
    %p88 = scmp.ne.s32.totalorder %s77, %s80
    %p89 = scmp.eq.s32.totalorder %s20, 1
    %p90 = por %p88, %p89
    %p91 = scmp.ne.s32.totalorder %s80, %s81
    %p92 = scmp.eq.s32.totalorder %s20, 0
    %p93 = por %p91, %p92
    %p94 = scmp.ne.s32.totalorder %s80, %s81
    %p95 = scmp.eq.s32.totalorder %s21, 1
    %p96 = por %p94, %p95
    %p98 = scmp.ne.s32.totalorder %s81, %s97
    %p99 = scmp.eq.s32.totalorder %s21, 0
    %p100 = por %p98, %p99
    %s102 = sadd.s32 %s101, 1
    %p105 = scmp.eq.s32.totalorder %s15, 1
    %p106 = scmp.ne.s32.totalorder %s101, %s103
    %p107 = scmp.eq.s32.totalorder %s15, 0
    %p108 = por %p106, %p107
    %p109 = scmp.ne.s32.totalorder %s101, %s103
    %p110 = scmp.eq.s32.totalorder %s20, 1
    %p111 = por %p109, %p110
    %p112 = scmp.ne.s32.totalorder %s103, %s104
    %p113 = scmp.eq.s32.totalorder %s20, 0
    %p114 = por %p112, %p113
    %p115 = scmp.ne.s32.totalorder %s103, %s104
    %p116 = scmp.eq.s32.totalorder %s21, 1
    %p117 = por %p115, %p116
    %p119 = scmp.ne.s32.totalorder %s104, %s118
    %p120 = scmp.eq.s32.totalorder %s21, 0
    %p121 = por %p119, %p120
    %s123 = sadd.s32 %s122, 1
    %p126 = scmp.eq.s32.totalorder %s15, 1
    %p127 = scmp.ne.s32.totalorder %s122, %s124
    %p128 = scmp.eq.s32.totalorder %s15, 0
    %p129 = por %p127, %p128
    %p130 = scmp.ne.s32.totalorder %s122, %s124
    %p131 = scmp.eq.s32.totalorder %s20, 1
    %p132 = por %p130, %p131
    %p133 = scmp.ne.s32.totalorder %s124, %s125
    %p134 = scmp.eq.s32.totalorder %s20, 0
    %p135 = por %p133, %p134
    %p136 = scmp.ne.s32.totalorder %s124, %s125
    %p137 = scmp.eq.s32.totalorder %s21, 1
    %p138 = por %p136, %p137
    %p140 = scmp.ne.s32.totalorder %s125, %s139
    %p141 = scmp.eq.s32.totalorder %s21, 0
    %p142 = por %p140, %p141
    %s144 = sadd.s32 %s143, 1
    %p147 = scmp.eq.s32.totalorder %s15, 1
    %p148 = scmp.ne.s32.totalorder %s143, %s145
    %p149 = scmp.eq.s32.totalorder %s15, 0
    %p150 = por %p148, %p149
    %p151 = scmp.ne.s32.totalorder %s143, %s145
    %p152 = scmp.eq.s32.totalorder %s20, 1
    %p153 = por %p151, %p152
    %p154 = scmp.ne.s32.totalorder %s145, %s146
    %p155 = scmp.eq.s32.totalorder %s20, 0
    %p156 = por %p154, %p155
    %p157 = scmp.ne.s32.totalorder %s145, %s146
    %p158 = scmp.eq.s32.totalorder %s21, 1
    %p159 = por %p157, %p158
    %p161 = scmp.ne.s32.totalorder %s146, %s160
    %p162 = scmp.eq.s32.totalorder %s21, 0
    %p163 = por %p161, %p162
    %s165 = sadd.s32 %s164, 1
    %p168 = scmp.eq.s32.totalorder %s15, 1
    %p169 = scmp.ne.s32.totalorder %s164, %s166
    %p170 = scmp.eq.s32.totalorder %s15, 0
    %p171 = por %p169, %p170
    %p172 = scmp.ne.s32.totalorder %s164, %s166
    %p173 = scmp.eq.s32.totalorder %s20, 1
    %p174 = por %p172, %p173
    %p175 = scmp.ne.s32.totalorder %s166, %s167
    %p176 = scmp.eq.s32.totalorder %s20, 0
    %p177 = por %p175, %p176
    %p178 = scmp.ne.s32.totalorder %s166, %s167
    %p179 = scmp.eq.s32.totalorder %s21, 1
    %p180 = por %p178, %p179
    %p182 = scmp.ne.s32.totalorder %s167, %s181
    %p183 = scmp.eq.s32.totalorder %s21, 0
    %p184 = por %p182, %p183
    %s185 = ssub.s32 %s15, %s22
    %p186 = scmp.eq.s32.totalorder %s185, 0
    %s188 = sadd.s32 %s187, 1
    %s189 = scalar_select %p186, %s187, %s188
    %p192 = pneg %p186
    %p193 = scmp.eq.s32.totalorder %s15, 1
    %p194 = por %p192, %p193
    %p195 = scmp.ne.s32.totalorder %s187, %s190
    %p196 = scmp.eq.s32.totalorder %s15, 0
    %p197 = por %p195, %p196
    %p198 = scmp.ne.s32.totalorder %s187, %s190
    %p199 = scmp.eq.s32.totalorder %s20, 1
    %p200 = por %p198, %p199
    %p201 = scmp.ne.s32.totalorder %s190, %s191
    %p202 = scmp.eq.s32.totalorder %s20, 0
    %p203 = por %p201, %p202
    %p204 = scmp.ne.s32.totalorder %s190, %s191
    %p205 = scmp.eq.s32.totalorder %s21, 1
    %p206 = por %p204, %p205
    %p208 = scmp.ne.s32.totalorder %s191, %s207
    %p209 = scmp.eq.s32.totalorder %s21, 0
    %p210 = por %p208, %p209
    %s211 = ssub.s32 %s15, %s22
    %p212 = scmp.eq.s32.totalorder %s211, 0
    %s214 = sadd.s32 %s213, 1
    %s215 = scalar_select %p212, %s213, %s214
    %p218 = pneg %p212
    %p219 = scmp.eq.s32.totalorder %s15, 1
    %p220 = por %p218, %p219
    %p221 = scmp.ne.s32.totalorder %s213, %s216
    %p222 = scmp.eq.s32.totalorder %s15, 0
    %p223 = por %p221, %p222
    %p224 = scmp.ne.s32.totalorder %s213, %s216
    %p225 = scmp.eq.s32.totalorder %s20, 1
    %p226 = por %p224, %p225
    %p227 = scmp.ne.s32.totalorder %s216, %s217
    %p228 = scmp.eq.s32.totalorder %s20, 0
    %p229 = por %p227, %p228
    %p230 = scmp.ne.s32.totalorder %s216, %s217
    %p231 = scmp.eq.s32.totalorder %s21, 1
    %p232 = por %p230, %p231
    %p234 = scmp.ne.s32.totalorder %s217, %s233
    %p235 = scmp.eq.s32.totalorder %s21, 0
    %p236 = por %p234, %p235
    %p237 = scmp.le.s32.totalorder 1, %s15
    %p238 = scmp.lt.s32.totalorder %s15, 3
    %p239 = pnand %p237, %p238
    %p240 = pneg %p239
    // Predicated region
    $region9: #{fre_layer_forward.2} parent=5 // pred_check
      _
    $region10: #{fre_layer_forward.2} parent=5 // pred_check_branch
      %242 = sbr.rel (%p239) target = $region12
    $region11: #{fre_layer_forward.2} parent=5 // pred_region
      %s243 = ssub.s32 %s15, 1
      // Predicated region
      $region13: #{fre_layer_forward.2} parent=11 // pred_check
        %p244 = pneg %p114
      $region14: #{fre_layer_forward.2} parent=11 // pred_check_branch
        %246 = sbr.rel (%p244) target = $region16
      $region15: #{fre_layer_forward.2} parent=11 // pred_region
        _
      $region16: #{fre_layer_forward.2} parent=11 // pred_fallthru
        _
      // Predicated region
      $region17: #{fre_layer_forward.2} parent=11 // pred_check
        %p247 = pneg %p135
      $region18: #{fre_layer_forward.2} parent=11 // pred_check_branch
        %249 = sbr.rel (%p247) target = $region20
      $region19: #{fre_layer_forward.2} parent=11 // pred_region
        _
      $region20: #{fre_layer_forward.2} parent=11 // pred_fallthru
        _
      // Predicated region
      $region21: #{fre_layer_forward.2} parent=11 // pred_check
        %p250 = pneg %p156
      $region22: #{fre_layer_forward.2} parent=11 // pred_check_branch
        %252 = sbr.rel (%p250) target = $region24
      $region23: #{fre_layer_forward.2} parent=11 // pred_region
        _
      $region24: #{fre_layer_forward.2} parent=11 // pred_fallthru
        _
      // Predicated region
      $region25: #{fre_layer_forward.2} parent=11 // pred_check
        %p253 = pneg %p177
      $region26: #{fre_layer_forward.2} parent=11 // pred_check_branch
        %255 = sbr.rel (%p253) target = $region28
      $region27: #{fre_layer_forward.2} parent=11 // pred_region
        _
      $region28: #{fre_layer_forward.2} parent=11 // pred_fallthru
        _
    $region12: #{fre_layer_forward.2} parent=5 // pred_fallthru
      _
    %p256 = scmp.lt.s32.totalorder %s15, 2
    // Predicated region
    $region29: #{fre_layer_forward.2} parent=5 // pred_check
      %p257 = pneg %p256
    $region30: #{fre_layer_forward.2} parent=5 // pred_check_branch
      %259 = sbr.rel (%p257) target = $region32
    $region31: #{fre_layer_forward.2} parent=5 // pred_region
      // Predicated region
      $region33: #{fre_layer_forward.2} parent=31 // pred_check
        %p260 = pneg %p35
      $region34: #{fre_layer_forward.2} parent=31 // pred_check_branch
        %262 = sbr.rel (%p260) target = $region36
      $region35: #{fre_layer_forward.2} parent=31 // pred_region
        %p263 = scmp.lt.s32.totalorder %s15, 1
        %s264 = scalar_select %p263, %s15, 1
        %s265 = smul.addr %s264, 3
        %s266 = smul.addr %s265, 4
        %s267 = scalar_lea.vmem %s0, %s266
      $region36: #{fre_layer_forward.2} parent=31 // pred_fallthru
        _
      // Predicated region
      $region37: #{fre_layer_forward.2} parent=31 // pred_check
        %p268 = pneg %p61
      $region38: #{fre_layer_forward.2} parent=31 // pred_check_branch
        %270 = sbr.rel (%p268) target = $region40
      $region39: #{fre_layer_forward.2} parent=31 // pred_region
        %p271 = scmp.lt.s32.totalorder %s15, 1
        %s272 = scalar_select %p271, %s15, 1
        %s273 = smul.addr %s272, 2
        %s274 = smul.addr %s273, 4
        %s275 = scalar_lea.vmem %s1, %s274
      $region40: #{fre_layer_forward.2} parent=31 // pred_fallthru
        _
      // Predicated region
      $region41: #{fre_layer_forward.2} parent=31 // pred_check
        %p276 = pneg %p87
      $region42: #{fre_layer_forward.2} parent=31 // pred_check_branch
        %278 = sbr.rel (%p276) target = $region44
      $region43: #{fre_layer_forward.2} parent=31 // pred_region
        %p279 = scmp.lt.s32.totalorder %s15, 1
        %s280 = scalar_select %p279, %s15, 1
        %s281 = smul.addr %s280, 2
        %s282 = smul.addr %s281, 4
        %s283 = scalar_lea.vmem %s2, %s282
      $region44: #{fre_layer_forward.2} parent=31 // pred_fallthru
        _
    $region32: #{fre_layer_forward.2} parent=5 // pred_fallthru
      _
    %p284 = scmp.le.s32.totalorder 1, %s15
    %p285 = scmp.lt.s32.totalorder %s15, 3
    %p286 = pnand %p284, %p285
    %p287 = pneg %p286
    // Predicated region
    $region45: #{fre_layer_forward.2} parent=5 // pred_check
      _
    $region46: #{fre_layer_forward.2} parent=5 // pred_check_branch
      %289 = sbr.rel (%p286) target = $region48
    $region47: #{fre_layer_forward.2} parent=5 // pred_region
      %s290 = ssub.s32 %s15, 1
      %p291 = scmp.lt.s32.totalorder %s20, 1
      %s292 = scalar_select %p291, %s20, 1
      %s293 = smul.addr %s292, 3
      %s294 = smul.addr %s293, 4
      %s295 = scalar_lea.vmem %s0, %s294
      %p296 = pneg %p41
      %p297 = pneg %p38
      %p298 = scmp.lt.s32.totalorder %s20, 1
      %s299 = scalar_select %p298, %s20, 1
      %s300 = smul.addr %s299, 2
      %s301 = smul.addr %s300, 4
      %s302 = scalar_lea.vmem %s1, %s301
      %p303 = pneg %p67
      %p304 = pneg %p64
      %p305 = scmp.lt.s32.totalorder %s20, 1
      %s306 = scalar_select %p305, %s20, 1
      %s307 = smul.addr %s306, 2
      %s308 = smul.addr %s307, 4
      %s309 = scalar_lea.vmem %s2, %s308
      %p310 = pneg %p93
      %p311 = pneg %p90
      %p312 = pneg %p114
      %p313 = pneg %p111
      %p314 = pneg %p135
      %p315 = pneg %p132
      %p316 = pneg %p156
      %p317 = pneg %p153
      %p318 = pneg %p177
      %p319 = pneg %p174
      %p320 = pneg %p203
      %p321 = pneg %p200
      %p322 = scmp.lt.s32.totalorder %s20, 1
      %s323 = scalar_select %p322, %s20, 1
      %s324 = smul.addr %s323, 2
      %s325 = smul.addr %s324, 4
      %s326 = scalar_lea.vmem %s7, %s325
      %p327 = pneg %p229
      %p328 = pneg %p226
      %p329 = scmp.lt.s32.totalorder %s20, 1
      %s330 = scalar_select %p329, %s20, 1
      %s331 = smul.addr %s330, 2
      %s332 = smul.addr %s331, 4
      %s333 = scalar_lea.vmem %s8, %s332
      %p334 = scmp.lt.s32.totalorder %s20, 1
      %s335 = scalar_select %p334, %s20, 1
      %s336 = smul.addr %s335, 3
      %s337 = smul.addr %s336, 4
      %s338 = scalar_lea.vmem %s0, %s337
      %p339 = scmp.lt.s32.totalorder %s20, 1
      %s340 = scalar_select %p339, %s20, 1
      %s341 = smul.addr %s340, 2
      %s342 = smul.addr %s341, 4
      %s343 = scalar_lea.vmem %s1, %s342
      %p344 = scmp.lt.s32.totalorder %s20, 1
      %s345 = scalar_select %p344, %s20, 1
      %s346 = smul.addr %s345, 2
      %s347 = smul.addr %s346, 4
      %s348 = scalar_lea.vmem %s2, %s347
      %p349 = scmp.lt.s32.totalorder %s20, 1
      %s350 = scalar_select %p349, %s20, 1
      %s351 = smul.addr %s350, 2
      %s352 = smul.addr %s351, 4
      %s353 = scalar_lea.vmem %s7, %s352
      %p354 = scmp.lt.s32.totalorder %s20, 1
      %s355 = scalar_select %p354, %s20, 1
      %s356 = smul.addr %s355, 2
      %s357 = smul.addr %s356, 4
      %s358 = scalar_lea.vmem %s8, %s357
      %v359 = vld [vmem:[%s338] sm:$0xff]
      %v360 = vld [vmem:[%s338 + $0x8] sm:$0xf]
      %362 = vst [vmem:[#allocation1] ss:$2 sm:$0xff] %v359
      %v363 = vld.sshfl [vmem:[#allocation1] sm:$0xff pattern:$0x75316420]
      %v364 = vld.sshfl [vmem:[#allocation1 + $0x8] sm:$0xff pattern:$0x75316420]
      %s368 = scalar_lea.vmem [#allocation1], 1
      %369 = vst [vmem:[%s368] ss:$2 sm:$0xff] %v359
      %s370 = scalar_lea.vmem [#allocation1], 17
      %371 = vst [vmem:[%s370] ss:$2 sm:$0xff] %v360
      %v372 = vld.sshfl [vmem:[#allocation1] sm:$0xff pattern:$0x75316420]
      %v373 = vld.sshfl [vmem:[#allocation1 + $0x8] sm:$0xff pattern:$0x75316420]
      %v374 = vld.sshfl [vmem:[#allocation1 + $0x10] sm:$0xff pattern:$0x75316420]
      %375 = vrot.lane.b32.xlu0 %v372, 127
      %v376 = vpop.permute.xlu0 %375
      %377 = vrot.lane.b32.xlu0 %v373, 127
      %v378 = vpop.permute.xlu0 %377
      %379 = vrot.lane.b32.xlu0 %v374, 127
      %v380 = vpop.permute.xlu0 %379
      %vm381 = vcmask 1039360
      %v382 = vsel %vm381, %v376, %v378
      %v383 = vsel %vm381, %v378, %v380
      %386 = vst [vmem:[#allocation1] ss:$2 sm:$0xff] %v359
      %s387 = scalar_lea.vmem [#allocation1], 16
      %388 = vst [vmem:[%s387] ss:$2 sm:$0xff] %v360
      %v389 = vld.sshfl [vmem:[#allocation1] sm:$0xff pattern:$0x75316420]
      %v390 = vld.sshfl [vmem:[#allocation1 + $0x8] sm:$0xff pattern:$0x75316420]
      %v391 = vld.sshfl [vmem:[#allocation1 + $0x10] sm:$0xff pattern:$0x75316420]
      %392 = vrot.lane.b32.xlu0 %v389, 126
      %v393 = vpop.permute.xlu0 %392
      %394 = vrot.lane.b32.xlu0 %v390, 126
      %v395 = vpop.permute.xlu0 %394
      %396 = vrot.lane.b32.xlu0 %v391, 126
      %v397 = vpop.permute.xlu0 %396
      %vm398 = vcmask 1031168
      %v399 = vsel %vm398, %v393, %v395
      %v400 = vsel %vm398, %v395, %v397
      %s403 = scalar_lea.vmem [#allocation1], 1
      %404 = vst [vmem:[%s403] ss:$2 sm:$0xff] %v359
      %s405 = scalar_lea.vmem [#allocation1], 17
      %406 = vst [vmem:[%s405] ss:$2 sm:$0xff] %v360
      %v407 = vld.sshfl [vmem:[#allocation1] sm:$0xff pattern:$0x75316420]
      %v408 = vld.sshfl [vmem:[#allocation1 + $0x8] sm:$0xff pattern:$0x75316420]
      %v409 = vld.sshfl [vmem:[#allocation1 + $0x10] sm:$0xff pattern:$0x75316420]
      %410 = vrot.lane.b32.xlu0 %v407, 112
      %v411 = vpop.permute.xlu0 %410
      %412 = vrot.lane.b32.xlu0 %v408, 112
      %v413 = vpop.permute.xlu0 %412
      %414 = vrot.lane.b32.xlu0 %v409, 112
      %v415 = vpop.permute.xlu0 %414
      %vm416 = vcmask 916480
      %v417 = vsel %vm416, %v411, %v413
      %v418 = vsel %vm416, %v413, %v415
      %421 = vst [vmem:[#allocation1] ss:$2 sm:$0xff] %v359
      %s422 = scalar_lea.vmem [#allocation1], 16
      %423 = vst [vmem:[%s422] ss:$2 sm:$0xff] %v360
      %v424 = vld.sshfl [vmem:[#allocation1] sm:$0xff pattern:$0x75316420]
      %v425 = vld.sshfl [vmem:[#allocation1 + $0x8] sm:$0xff pattern:$0x75316420]
      %v426 = vld.sshfl [vmem:[#allocation1 + $0x10] sm:$0xff pattern:$0x75316420]
      %427 = vrot.lane.b32.xlu0 %v424, 111
      %v428 = vpop.permute.xlu0 %427
      %429 = vrot.lane.b32.xlu0 %v425, 111
      %v430 = vpop.permute.xlu0 %429
      %431 = vrot.lane.b32.xlu0 %v426, 111
      %v432 = vpop.permute.xlu0 %431
      %vm433 = vcmask 908288
      %v434 = vsel %vm433, %v428, %v430
      %v435 = vsel %vm433, %v430, %v432
      %s438 = scalar_lea.vmem [#allocation1], 1
      %439 = vst [vmem:[%s438] ss:$2 sm:$0xff] %v359
      %s440 = scalar_lea.vmem [#allocation1], 17
      %441 = vst [vmem:[%s440] ss:$2 sm:$0xff] %v360
      %v442 = vld.sshfl [vmem:[#allocation1] sm:$0xff pattern:$0x75316420]
      %v443 = vld.sshfl [vmem:[#allocation1 + $0x8] sm:$0xff pattern:$0x75316420]
      %v444 = vld.sshfl [vmem:[#allocation1 + $0x10] sm:$0xff pattern:$0x75316420]
      %445 = vrot.lane.b32.xlu0 %v442, 110
      %v446 = vpop.permute.xlu0 %445
      %447 = vrot.lane.b32.xlu0 %v443, 110
      %v448 = vpop.permute.xlu0 %447
      %449 = vrot.lane.b32.xlu0 %v444, 110
      %v450 = vpop.permute.xlu0 %449
      %vm451 = vcmask 900096
      %v452 = vsel %vm451, %v446, %v448
      %v453 = vsel %vm451, %v448, %v450
      %456 = vst [vmem:[#allocation1] ss:$2 sm:$0xff] %v359
      %s457 = scalar_lea.vmem [#allocation1], 16
      %458 = vst [vmem:[%s457] ss:$2 sm:$0xff] %v360
      %v459 = vld.sshfl [vmem:[#allocation1] sm:$0xff pattern:$0x75316420]
      %v460 = vld.sshfl [vmem:[#allocation1 + $0x8] sm:$0xff pattern:$0x75316420]
      %v461 = vld.sshfl [vmem:[#allocation1 + $0x10] sm:$0xff pattern:$0x75316420]
      %462 = vrot.lane.b32.xlu0 %v459, 96
      %v463 = vpop.permute.xlu0 %462
      %464 = vrot.lane.b32.xlu0 %v460, 96
      %v465 = vpop.permute.xlu0 %464
      %466 = vrot.lane.b32.xlu0 %v461, 96
      %v467 = vpop.permute.xlu0 %466
      %vm468 = vcmask 785408
      %v469 = vsel %vm468, %v463, %v465
      %v470 = vsel %vm468, %v465, %v467
      %s473 = scalar_lea.vmem [#allocation1], 1
      %474 = vst [vmem:[%s473] ss:$2 sm:$0xff] %v359
      %s475 = scalar_lea.vmem [#allocation1], 17
      %476 = vst [vmem:[%s475] ss:$2 sm:$0xff] %v360
      %v477 = vld.sshfl [vmem:[#allocation1] sm:$0xff pattern:$0x75316420]
      %v478 = vld.sshfl [vmem:[#allocation1 + $0x8] sm:$0xff pattern:$0x75316420]
      %v479 = vld.sshfl [vmem:[#allocation1 + $0x10] sm:$0xff pattern:$0x75316420]
      %480 = vrot.lane.b32.xlu0 %v477, 95
      %v481 = vpop.permute.xlu0 %480
      %482 = vrot.lane.b32.xlu0 %v478, 95
      %v483 = vpop.permute.xlu0 %482
      %484 = vrot.lane.b32.xlu0 %v479, 95
      %v485 = vpop.permute.xlu0 %484
      %vm486 = vcmask 777216
      %v487 = vsel %vm486, %v481, %v483
      %v488 = vsel %vm486, %v483, %v485
      %491 = vst [vmem:[#allocation1] ss:$2 sm:$0xff] %v359
      %s492 = scalar_lea.vmem [#allocation1], 16
      %493 = vst [vmem:[%s492] ss:$2 sm:$0xff] %v360
      %v494 = vld.sshfl [vmem:[#allocation1] sm:$0xff pattern:$0x75316420]
      %v495 = vld.sshfl [vmem:[#allocation1 + $0x8] sm:$0xff pattern:$0x75316420]
      %v496 = vld.sshfl [vmem:[#allocation1 + $0x10] sm:$0xff pattern:$0x75316420]
      %497 = vrot.lane.b32.xlu0 %v494, 94
      %v498 = vpop.permute.xlu0 %497
      %499 = vrot.lane.b32.xlu0 %v495, 94
      %v500 = vpop.permute.xlu0 %499
      %501 = vrot.lane.b32.xlu0 %v496, 94
      %v502 = vpop.permute.xlu0 %501
      %vm503 = vcmask 769024
      %v504 = vsel %vm503, %v498, %v500
      %v505 = vsel %vm503, %v500, %v502
      %vm506 = vcmask 1043456
      %v507 = vsel %vm506, %v363, %v382
      %v508 = vsel %vm506, %v364, %v383
      %v509 = vsel %vm506, %v399, %v417
      %v510 = vsel %vm506, %v400, %v418
      %v511 = vsel %vm506, %v434, %v452
      %v512 = vsel %vm506, %v435, %v453
      %v513 = vsel %vm506, %v469, %v487
      %v514 = vsel %vm506, %v470, %v488
      %v515 = vld [vmem:[%s3] sm:$0xff]
      %v516 = vld [vmem:[%s4] sm:$0xff]
      %518 = vset.pattern.permute.xlu0 0
      %519 = vperm.xlu0 %518, %v516
      %v520 = vpop.permute.xlu0 %519
      %vm522 = vcmask 293888
      %v524 = vsel %vm522, %v515, 0
      %v526 = vsel %vm506, %v504, 0
      %v528 = vsel %vm506, %v505, 0
      %530 = vmatpush.msra.mxu0 0.0
      %531 = vmatpush.msra.mxu0 0.0
      %532 = vmatpush.msra.mxu0 0.0
      %533 = vmatpush.msra.mxu0 0.0
      %534 = vmatpush.msra.mxu0 0.0
      %535 = vmatpush.msra.mxu0 0.0
      %536 = vmatpush.msra.mxu0 0.0
      %537 = vmatpush.msra.mxu0 0.0
      %538 = vmatpush.msra.mxu0 0.0
      %539 = vmatpush.msra.mxu0 0.0
      %540 = vmatpush.msra.mxu0 0.0
      %541 = vmatpush.msra.mxu0 %v526
      %542 = vmatpush.msra.mxu0 %v513
      %543 = vmatpush.msra.mxu0 %v511
      %544 = vmatpush.msra.mxu0 %v509
      %545 = vmatpush.msra.mxu0 %v507
      %546 = vmatmul.f32.gmra.mxu0 %v524
      %v547 = vpop.f32.mrf.mxu0
      %v548 = vadd.f32 %v520, %v547
      %549 = vdwg.mxu0
      %550 = vmatpush.msra.mxu0 0.0
      %551 = vmatpush.msra.mxu0 0.0
      %552 = vmatpush.msra.mxu0 0.0
      %553 = vmatpush.msra.mxu0 0.0
      %554 = vmatpush.msra.mxu0 0.0
      %555 = vmatpush.msra.mxu0 0.0
      %556 = vmatpush.msra.mxu0 0.0
      %557 = vmatpush.msra.mxu0 0.0
      %558 = vmatpush.msra.mxu0 0.0
      %559 = vmatpush.msra.mxu0 0.0
      %560 = vmatpush.msra.mxu0 0.0
      %561 = vmatpush.msra.mxu0 %v528
      %562 = vmatpush.msra.mxu0 %v514
      %563 = vmatpush.msra.mxu0 %v512
      %564 = vmatpush.msra.mxu0 %v510
      %565 = vmatpush.msra.mxu0 %v508
      %566 = vmatmul.f32.gmra.mxu0 %v524
      %v567 = vpop.f32.mrf.mxu0
      %v568 = vadd.f32 %v520, %v567
      %569 = vdwg.mxu0
      %v570 = vmul.f32 %v548, 0.1
      %v571 = vmul.f32 %v568, 0.1
      %v572 = vmax.f32 %v548, %v570
      %v573 = vmax.f32 %v568, %v571
      %v574 = vlaneseq
      %v575 = vand.u32 %v574, 127
      %v576 = vadd.s32 %v575, 128
      %vm577 = vcmp.lt.s32.totalorder %v575, 0
      %v578 = vsub.s32 0, %v575
      %v579 = vsel %vm577, %v578, %v575
      %v580 = vshrl.u32 %v579, 4
      %v581 = vand.u32 %v579, 15
      %v582 = vsub.s32 0, %v581
      %v583 = vsel %vm577, %v582, %v581
      %vm584 = vcmp.lt.s32.totalorder %v576, 0
      %v585 = vsub.s32 0, %v576
      %v586 = vsel %vm584, %v585, %v576
      %v587 = vshrl.u32 %v586, 4
      %v588 = vand.u32 %v586, 15
      %v589 = vsub.s32 0, %v588
      %v590 = vsel %vm584, %v589, %v588
      %vm591 = vcmp.ne.s32.totalorder %v583, 0
      %vm592 = vcmp.ne.s32.totalorder %v590, 0
      %vm593 = vcmp.lt.s32.totalorder %v583, 0
      %vm594 = vcmp.lt.s32.totalorder %v590, 0
      %vm595 = vmand %vm593, %vm591
      %vm596 = vmand %vm594, %vm592
      %v597 = vadd.s32 %v583, 16
      %v598 = vadd.s32 %v590, 16
      %v599 = vsel %vm595, %v597, %v583
      %v600 = vsel %vm596, %v598, %v590
      %vm601 = vcmp.lt.s32.totalorder %v599, 9
      %vm602 = vcmp.lt.s32.totalorder %v600, 9
      %v603 = vsel %vm601, 1, 0
      %v604 = vsel %vm602, 1, 0
      %vm605 = vcmp.eq.s32.totalorder %v603, 1
      %vm606 = vcmp.eq.s32.totalorder %v604, 1
      %v607 = vsel %vm605, %v572, 0.0
      %v608 = vsel %vm606, %v573, 0.0
      %611 = vrot.lane.b32.xlu0 %v607, 17
      %v612 = vpop.permute.xlu0 %611
      %613 = vrot.lane.b32.xlu0 %v608, 17
      %v614 = vpop.permute.xlu0 %613
      %vm615 = vcmask 138240
      %v616 = vsel %vm615, %v612, %v614
      %v620 = vsel %vm615, 0.0, %v612
      %v621 = vsel %vm615, %v614, 0.0
      %624 = vrot.lane.b32.xlu0 %v620, 127
      %v625 = vpop.permute.xlu0 %624
      %626 = vrot.lane.b32.xlu0 %v616, 127
      %v627 = vpop.permute.xlu0 %626
      %628 = vrot.lane.b32.xlu0 %v621, 127
      %v629 = vpop.permute.xlu0 %628
      %v630 = vsel %vm381, %v625, %v627
      %v631 = vsel %vm381, %v627, %v629
      %634 = vrot.lane.b32.xlu0 %v620, 126
      %v635 = vpop.permute.xlu0 %634
      %636 = vrot.lane.b32.xlu0 %v616, 126
      %v637 = vpop.permute.xlu0 %636
      %638 = vrot.lane.b32.xlu0 %v621, 126
      %v639 = vpop.permute.xlu0 %638
      %v640 = vsel %vm398, %v635, %v637
      %v641 = vsel %vm398, %v637, %v639
      %644 = vrot.lane.b32.xlu0 %v620, 112
      %v645 = vpop.permute.xlu0 %644
      %646 = vrot.lane.b32.xlu0 %v616, 112
      %v647 = vpop.permute.xlu0 %646
      %648 = vrot.lane.b32.xlu0 %v621, 112
      %v649 = vpop.permute.xlu0 %648
      %v650 = vsel %vm416, %v645, %v647
      %v651 = vsel %vm416, %v647, %v649
      %654 = vrot.lane.b32.xlu0 %v620, 111
      %v655 = vpop.permute.xlu0 %654
      %656 = vrot.lane.b32.xlu0 %v616, 111
      %v657 = vpop.permute.xlu0 %656
      %658 = vrot.lane.b32.xlu0 %v621, 111
      %v659 = vpop.permute.xlu0 %658
      %v660 = vsel %vm433, %v655, %v657
      %v661 = vsel %vm433, %v657, %v659
      %664 = vrot.lane.b32.xlu0 %v620, 110
      %v665 = vpop.permute.xlu0 %664
      %666 = vrot.lane.b32.xlu0 %v616, 110
      %v667 = vpop.permute.xlu0 %666
      %668 = vrot.lane.b32.xlu0 %v621, 110
      %v669 = vpop.permute.xlu0 %668
      %v670 = vsel %vm451, %v665, %v667
      %v671 = vsel %vm451, %v667, %v669
      %674 = vrot.lane.b32.xlu0 %v620, 96
      %v675 = vpop.permute.xlu0 %674
      %676 = vrot.lane.b32.xlu0 %v616, 96
      %v677 = vpop.permute.xlu0 %676
      %678 = vrot.lane.b32.xlu0 %v621, 96
      %v679 = vpop.permute.xlu0 %678
      %v680 = vsel %vm468, %v675, %v677
      %v681 = vsel %vm468, %v677, %v679
      %684 = vrot.lane.b32.xlu0 %v620, 95
      %v685 = vpop.permute.xlu0 %684
      %686 = vrot.lane.b32.xlu0 %v616, 95
      %v687 = vpop.permute.xlu0 %686
      %688 = vrot.lane.b32.xlu0 %v621, 95
      %v689 = vpop.permute.xlu0 %688
      %v690 = vsel %vm486, %v685, %v687
      %v691 = vsel %vm486, %v687, %v689
      %694 = vrot.lane.b32.xlu0 %v620, 94
      %v695 = vpop.permute.xlu0 %694
      %696 = vrot.lane.b32.xlu0 %v616, 94
      %v697 = vpop.permute.xlu0 %696
      %698 = vrot.lane.b32.xlu0 %v621, 94
      %v699 = vpop.permute.xlu0 %698
      %v700 = vsel %vm503, %v695, %v697
      %v701 = vsel %vm503, %v697, %v699
      %v704 = vld [vmem:[%s5] sm:$0xf]
      %v705 = vld [vmem:[%s6] sm:$0xf]
      %707 = vset.pattern.permute.xlu0 0
      %708 = vperm.xlu0 %707, %v705
      %v709 = vpop.permute.xlu0 %708
      %vm711 = vcmask 588800
      %v713 = vsel %vm711, %v704, 0
      %715 = vmatpush.msra.mxu0 0.0
      %716 = vmatpush.msra.mxu0 0.0
      %717 = vmatpush.msra.mxu0 0.0
      %718 = vmatpush.msra.mxu0 0.0
      %719 = vmatpush.msra.mxu0 0.0
      %720 = vmatpush.msra.mxu0 0.0
      %721 = vmatpush.msra.mxu0 0.0
      %722 = vmatpush.msra.mxu0 %v700
      %723 = vmatpush.msra.mxu0 %v690
      %724 = vmatpush.msra.mxu0 %v680
      %725 = vmatpush.msra.mxu0 %v670
      %726 = vmatpush.msra.mxu0 %v660
      %727 = vmatpush.msra.mxu0 %v650
      %728 = vmatpush.msra.mxu0 %v640
      %729 = vmatpush.msra.mxu0 %v630
      %730 = vmatpush.msra.mxu0 %v620
      %731 = vmatmul.f32.gmra.mxu0 %v713
      %v732 = vpop.f32.mrf.mxu0
      %v733 = vadd.f32 %v709, %v732
      %734 = vdwg.mxu0
      %735 = vmatpush.msra.mxu0 0.0
      %736 = vmatpush.msra.mxu0 0.0
      %737 = vmatpush.msra.mxu0 0.0
      %738 = vmatpush.msra.mxu0 0.0
      %739 = vmatpush.msra.mxu0 0.0
      %740 = vmatpush.msra.mxu0 0.0
      %741 = vmatpush.msra.mxu0 0.0
      %742 = vmatpush.msra.mxu0 %v701
      %743 = vmatpush.msra.mxu0 %v691
      %744 = vmatpush.msra.mxu0 %v681
      %745 = vmatpush.msra.mxu0 %v671
      %746 = vmatpush.msra.mxu0 %v661
      %747 = vmatpush.msra.mxu0 %v651
      %748 = vmatpush.msra.mxu0 %v641
      %749 = vmatpush.msra.mxu0 %v631
      %750 = vmatpush.msra.mxu0 %v616
      %751 = vmatmul.f32.gmra.mxu0 %v713
      %v752 = vpop.f32.mrf.mxu0
      %v753 = vadd.f32 %v709, %v752
      %754 = vdwg.mxu0
      %v755 = vld [vmem:[%s343] sm:$0xff]
      %757 = vst [vmem:[#allocation1] ss:$2 sm:$0xff] %v755
      %v758 = vld.sshfl [vmem:[#allocation1] sm:$0xff pattern:$0x75316420]
      %v759 = vld.sshfl [vmem:[#allocation1 + $0x8] sm:$0xff pattern:$0x75316420]
      %v762 = vmul.f32 %v733, %v758
      %v763 = vmul.f32 %v753, %v759
      %v766 = vrot.slane %v763, 4
      %v767 = vsel %vm506, %v762, %v766
      %769 = vst [vmem:[%s353] sm:$0xff] %v767
      %v770 = vld [vmem:[%s348] sm:$0xff]
      %772 = vst [vmem:[#allocation1] ss:$2 sm:$0xff] %v770
      %v773 = vld.sshfl [vmem:[#allocation1] sm:$0xff pattern:$0x75316420]
      %v774 = vld.sshfl [vmem:[#allocation1 + $0x8] sm:$0xff pattern:$0x75316420]
      %v777 = vmul.f32 %v733, %v773
      %v778 = vmul.f32 %v753, %v774
      %v781 = vrot.slane %v778, 4
      %v782 = vsel %vm506, %v777, %v781
      %784 = vst [vmem:[%s358] sm:$0xff] %v782
      %p785 = scmp.lt.s32.totalorder %s20, 1
      %s786 = scalar_select %p785, %s20, 1
      %s787 = smul.addr %s786, 2
      %s788 = smul.addr %s787, 4
      %s789 = scalar_lea.vmem %s7, %s788
      %p790 = scmp.lt.s32.totalorder %s20, 1
      %s791 = scalar_select %p790, %s20, 1
      %s792 = smul.addr %s791, 2
      %s793 = smul.addr %s792, 4
      %s794 = scalar_lea.vmem %s8, %s793
      // Predicated region
      $region49: #{fre_layer_forward.2} parent=47 // pred_check
        %p795 = pneg %p200
      $region50: #{fre_layer_forward.2} parent=47 // pred_check_branch
        %797 = sbr.rel (%p795) target = $region52
      $region51: #{fre_layer_forward.2} parent=47 // pred_region
        _
      $region52: #{fre_layer_forward.2} parent=47 // pred_fallthru
        _
      // Predicated region
      $region53: #{fre_layer_forward.2} parent=47 // pred_check
        %p798 = pneg %p226
      $region54: #{fre_layer_forward.2} parent=47 // pred_check_branch
        %800 = sbr.rel (%p798) target = $region56
      $region55: #{fre_layer_forward.2} parent=47 // pred_region
        _
      $region56: #{fre_layer_forward.2} parent=47 // pred_fallthru
        _
    $region48: #{fre_layer_forward.2} parent=5 // pred_fallthru
      _
    %p801 = scmp.le.s32.totalorder 2, %s15
    // Predicated region
    $region57: #{fre_layer_forward.2} parent=5 // pred_check
      %p802 = pneg %p801
    $region58: #{fre_layer_forward.2} parent=5 // pred_check_branch
      %804 = sbr.rel (%p802) target = $region60
    $region59: #{fre_layer_forward.2} parent=5 // pred_region
      %s805 = ssub.s32 %s15, 2
      // Predicated region
      $region61: #{fre_layer_forward.2} parent=59 // pred_check
        %p806 = pneg %p206
      $region62: #{fre_layer_forward.2} parent=59 // pred_check_branch
        %808 = sbr.rel (%p806) target = $region64
      $region63: #{fre_layer_forward.2} parent=59 // pred_region
        %p809 = scmp.lt.s32.totalorder %s21, 1
        %s810 = scalar_select %p809, %s21, 1
        %s811 = smul.addr %s810, 2
        %s812 = smul.addr %s811, 4
        %s813 = scalar_lea.vmem %s7, %s812
      $region64: #{fre_layer_forward.2} parent=59 // pred_fallthru
        _
      // Predicated region
      $region65: #{fre_layer_forward.2} parent=59 // pred_check
        %p814 = pneg %p232
      $region66: #{fre_layer_forward.2} parent=59 // pred_check_branch
        %816 = sbr.rel (%p814) target = $region68
      $region67: #{fre_layer_forward.2} parent=59 // pred_region
        %p817 = scmp.lt.s32.totalorder %s21, 1
        %s818 = scalar_select %p817, %s21, 1
        %s819 = smul.addr %s818, 2
        %s820 = smul.addr %s819, 4
        %s821 = scalar_lea.vmem %s8, %s820
      $region68: #{fre_layer_forward.2} parent=59 // pred_fallthru
        _
    $region60: #{fre_layer_forward.2} parent=5 // pred_fallthru
      _
  $region6: #{fre_layer_forward.2} parent=0 // loop_footer
    %s19 = sadd.s32 1, %s15
  $region7: #{fre_layer_forward.2} parent=0 // loop_footer_branch
    %14 = sbr.rel target = $region3
  $region8: #{fre_layer_forward.2} parent=0 // loop_exit
    _

// kernel: fre_layer_forward.3
$region0: #{fre_layer_forward.3}
  #allocation0 [shape = 'u32[]', space=smem, size = 0x4, offset = 0x4, fixed_abs, tag = 'smem constant byte address 0x4 - core index']
  #allocation1 [shape = 'u32[72,128]{1,0:T(1,128)}', space=vmem, size = 0x9000, scoped, tag = 'internal scratch']
  %s0 = inlined_call_operand.vmem [shape: f32[2,4,256], index: 0, kind: input, shape index: {}]
  %s1 = inlined_call_operand.vmem [shape: f32[2,4,256], index: 1, kind: input, shape index: {}]
  %s2 = inlined_call_operand.vmem [shape: f32[4,1], index: 2, kind: input, shape index: {}]
  %s3 = inlined_call_operand.vmem [shape: f32[4,4], index: 3, kind: input, shape index: {}]
  %s4 = inlined_call_operand.vmem [shape: f32[4,1], index: 4, kind: input, shape index: {}]
  %s5 = inlined_call_operand.vmem [shape: f32[2,4,256], index: 5, kind: output, shape index: {}]
  %s6 = sld [smem:[#allocation0]]
  $region53: #{fre_layer_forward.3} parent=0
    _
  %s8 = ssub.s32 1, %s6
  %s9 = scalar_select 0, %s8, %s6
  loop: start=0, step=1, limit=4
  $region2: #{fre_layer_forward.3} parent=0 // loop_pre_header
    _
  $region3: #{fre_layer_forward.3} parent=0 // loop_header
    %s11 = sphi 0, %s15
    %p12 = scmp.ge.s32.totalorder %s11, 4
    %s18 = sphi 0, %s30
    %s19 = sphi 0, %s26
    %s20 = sphi 0, %s18
    %s21 = sphi 0, %s19
    %s22 = sphi 0, %s20
    %s23 = sphi 0, %s21
    %s35 = sphi 0, %s37
    %s38 = sphi 0, %s35
    %s39 = sphi 0, %s38
    %s55 = sphi 0, %s39
    %s63 = sphi 0, %s65
    %s66 = sphi 0, %s63
    %s67 = sphi 0, %s66
    %s83 = sphi 0, %s67
    %s87 = sphi 0, %s87
    %s89 = sphi 0, %s87
    %s90 = sphi 0, %s89
    %s104 = sphi 0, %s90
    %s108 = sphi 0, %s108
    %s110 = sphi 0, %s108
    %s111 = sphi 0, %s110
    %s125 = sphi 0, %s111
    %s129 = sphi 0, %s129
    %s131 = sphi 0, %s129
    %s132 = sphi 0, %s131
    %s146 = sphi 0, %s132
    %s154 = sphi 0, %s156
    %s157 = sphi 0, %s154
    %s158 = sphi 0, %s157
    %s174 = sphi 0, %s158
  $region4: #{fre_layer_forward.3} parent=0 // loop_header_branch
    %14 = sbr.rel (%p12) target = $region8
  $region5: #{fre_layer_forward.3} parent=0 // loop_body
    %s16 = ssub.s32 %s11, 1
    %s17 = ssub.s32 %s11, 2
    %s24 = sadd.s32 1, %s19
    %p25 = scmp.ge.s32.totalorder %s24, 1
    %s26 = scalar_select %p25, 0, %s24
    %s27 = sadd.s32 1, %s18
    %s28 = scalar_select %p25, %s27, %s18
    %p29 = scmp.ge.s32.totalorder %s28, 2
    %s30 = scalar_select %p29, 0, %s28
    %s31 = ssub.s32 %s18, %s30
    %s32 = ssub.s32 %s19, %s26
    %s33 = sor.u32 %s31, %s32
    %p34 = scmp.eq.s32.totalorder %s33, 0
    %s36 = sadd.s32 %s35, 1
    %s37 = scalar_select %p34, %s35, %s36
    %p40 = pneg %p34
    %p41 = scmp.eq.s32.totalorder %s11, 1
    %p42 = por %p40, %p41
    %p43 = scmp.ne.s32.totalorder %s35, %s38
    %p44 = scmp.eq.s32.totalorder %s11, 0
    %p45 = por %p43, %p44
    %p46 = scmp.ne.s32.totalorder %s35, %s38
    %p47 = scmp.eq.s32.totalorder %s16, 1
    %p48 = por %p46, %p47
    %p49 = scmp.ne.s32.totalorder %s38, %s39
    %p50 = scmp.eq.s32.totalorder %s16, 0
    %p51 = por %p49, %p50
    %p52 = scmp.ne.s32.totalorder %s38, %s39
    %p53 = scmp.eq.s32.totalorder %s17, 1
    %p54 = por %p52, %p53
    %p56 = scmp.ne.s32.totalorder %s39, %s55
    %p57 = scmp.eq.s32.totalorder %s17, 0
    %p58 = por %p56, %p57
    %s59 = ssub.s32 %s18, %s30
    %s60 = ssub.s32 %s19, %s26
    %s61 = sor.u32 %s59, %s60
    %p62 = scmp.eq.s32.totalorder %s61, 0
    %s64 = sadd.s32 %s63, 1
    %s65 = scalar_select %p62, %s63, %s64
    %p68 = pneg %p62
    %p69 = scmp.eq.s32.totalorder %s11, 1
    %p70 = por %p68, %p69
    %p71 = scmp.ne.s32.totalorder %s63, %s66
    %p72 = scmp.eq.s32.totalorder %s11, 0
    %p73 = por %p71, %p72
    %p74 = scmp.ne.s32.totalorder %s63, %s66
    %p75 = scmp.eq.s32.totalorder %s16, 1
    %p76 = por %p74, %p75
    %p77 = scmp.ne.s32.totalorder %s66, %s67
    %p78 = scmp.eq.s32.totalorder %s16, 0
    %p79 = por %p77, %p78
    %p80 = scmp.ne.s32.totalorder %s66, %s67
    %p81 = scmp.eq.s32.totalorder %s17, 1
    %p82 = por %p80, %p81
    %p84 = scmp.ne.s32.totalorder %s67, %s83
    %p85 = scmp.eq.s32.totalorder %s17, 0
    %p86 = por %p84, %p85
    %s88 = sadd.s32 %s87, 1
    %p91 = scmp.eq.s32.totalorder %s11, 1
    %p92 = scmp.ne.s32.totalorder %s87, %s89
    %p93 = scmp.eq.s32.totalorder %s11, 0
    %p94 = por %p92, %p93
    %p95 = scmp.ne.s32.totalorder %s87, %s89
    %p96 = scmp.eq.s32.totalorder %s16, 1
    %p97 = por %p95, %p96
    %p98 = scmp.ne.s32.totalorder %s89, %s90
    %p99 = scmp.eq.s32.totalorder %s16, 0
    %p100 = por %p98, %p99
    %p101 = scmp.ne.s32.totalorder %s89, %s90
    %p102 = scmp.eq.s32.totalorder %s17, 1
    %p103 = por %p101, %p102
    %p105 = scmp.ne.s32.totalorder %s90, %s104
    %p106 = scmp.eq.s32.totalorder %s17, 0
    %p107 = por %p105, %p106
    %s109 = sadd.s32 %s108, 1
    %p112 = scmp.eq.s32.totalorder %s11, 1
    %p113 = scmp.ne.s32.totalorder %s108, %s110
    %p114 = scmp.eq.s32.totalorder %s11, 0
    %p115 = por %p113, %p114
    %p116 = scmp.ne.s32.totalorder %s108, %s110
    %p117 = scmp.eq.s32.totalorder %s16, 1
    %p118 = por %p116, %p117
    %p119 = scmp.ne.s32.totalorder %s110, %s111
    %p120 = scmp.eq.s32.totalorder %s16, 0
    %p121 = por %p119, %p120
    %p122 = scmp.ne.s32.totalorder %s110, %s111
    %p123 = scmp.eq.s32.totalorder %s17, 1
    %p124 = por %p122, %p123
    %p126 = scmp.ne.s32.totalorder %s111, %s125
    %p127 = scmp.eq.s32.totalorder %s17, 0
    %p128 = por %p126, %p127
    %s130 = sadd.s32 %s129, 1
    %p133 = scmp.eq.s32.totalorder %s11, 1
    %p134 = scmp.ne.s32.totalorder %s129, %s131
    %p135 = scmp.eq.s32.totalorder %s11, 0
    %p136 = por %p134, %p135
    %p137 = scmp.ne.s32.totalorder %s129, %s131
    %p138 = scmp.eq.s32.totalorder %s16, 1
    %p139 = por %p137, %p138
    %p140 = scmp.ne.s32.totalorder %s131, %s132
    %p141 = scmp.eq.s32.totalorder %s16, 0
    %p142 = por %p140, %p141
    %p143 = scmp.ne.s32.totalorder %s131, %s132
    %p144 = scmp.eq.s32.totalorder %s17, 1
    %p145 = por %p143, %p144
    %p147 = scmp.ne.s32.totalorder %s132, %s146
    %p148 = scmp.eq.s32.totalorder %s17, 0
    %p149 = por %p147, %p148
    %s150 = ssub.s32 %s18, %s30
    %s151 = ssub.s32 %s19, %s26
    %s152 = sor.u32 %s150, %s151
    %p153 = scmp.eq.s32.totalorder %s152, 0
    %s155 = sadd.s32 %s154, 1
    %s156 = scalar_select %p153, %s154, %s155
    %p159 = pneg %p153
    %p160 = scmp.eq.s32.totalorder %s11, 1
    %p161 = por %p159, %p160
    %p162 = scmp.ne.s32.totalorder %s154, %s157
    %p163 = scmp.eq.s32.totalorder %s11, 0
    %p164 = por %p162, %p163
    %p165 = scmp.ne.s32.totalorder %s154, %s157
    %p166 = scmp.eq.s32.totalorder %s16, 1
    %p167 = por %p165, %p166
    %p168 = scmp.ne.s32.totalorder %s157, %s158
    %p169 = scmp.eq.s32.totalorder %s16, 0
    %p170 = por %p168, %p169
    %p171 = scmp.ne.s32.totalorder %s157, %s158
    %p172 = scmp.eq.s32.totalorder %s17, 1
    %p173 = por %p171, %p172
    %p175 = scmp.ne.s32.totalorder %s158, %s174
    %p176 = scmp.eq.s32.totalorder %s17, 0
    %p177 = por %p175, %p176
    %p178 = scmp.le.s32.totalorder 1, %s11
    %p179 = scmp.lt.s32.totalorder %s11, 3
    %p180 = pnand %p178, %p179
    %p181 = pneg %p180
    // Predicated region
    $region9: #{fre_layer_forward.3} parent=5 // pred_check
      _
    $region10: #{fre_layer_forward.3} parent=5 // pred_check_branch
      %183 = sbr.rel (%p180) target = $region12
    $region11: #{fre_layer_forward.3} parent=5 // pred_region
      %s184 = ssub.s32 %s11, 1
      // Predicated region
      $region13: #{fre_layer_forward.3} parent=11 // pred_check
        %p185 = pneg %p100
      $region14: #{fre_layer_forward.3} parent=11 // pred_check_branch
        %187 = sbr.rel (%p185) target = $region16
      $region15: #{fre_layer_forward.3} parent=11 // pred_region
        _
      $region16: #{fre_layer_forward.3} parent=11 // pred_fallthru
        _
      // Predicated region
      $region17: #{fre_layer_forward.3} parent=11 // pred_check
        %p188 = pneg %p121
      $region18: #{fre_layer_forward.3} parent=11 // pred_check_branch
        %190 = sbr.rel (%p188) target = $region20
      $region19: #{fre_layer_forward.3} parent=11 // pred_region
        _
      $region20: #{fre_layer_forward.3} parent=11 // pred_fallthru
        _
      // Predicated region
      $region21: #{fre_layer_forward.3} parent=11 // pred_check
        %p191 = pneg %p142
      $region22: #{fre_layer_forward.3} parent=11 // pred_check_branch
        %193 = sbr.rel (%p191) target = $region24
      $region23: #{fre_layer_forward.3} parent=11 // pred_region
        _
      $region24: #{fre_layer_forward.3} parent=11 // pred_fallthru
        _
    $region12: #{fre_layer_forward.3} parent=5 // pred_fallthru
      _
    %p194 = scmp.lt.s32.totalorder %s11, 2
    // Predicated region
    $region25: #{fre_layer_forward.3} parent=5 // pred_check
      %p195 = pneg %p194
    $region26: #{fre_layer_forward.3} parent=5 // pred_check_branch
      %197 = sbr.rel (%p195) target = $region28
    $region27: #{fre_layer_forward.3} parent=5 // pred_region
      // Predicated region
      $region29: #{fre_layer_forward.3} parent=27 // pred_check
        %p198 = pneg %p45
      $region30: #{fre_layer_forward.3} parent=27 // pred_check_branch
        %200 = sbr.rel (%p198) target = $region32
      $region31: #{fre_layer_forward.3} parent=27 // pred_region
        %s201 = smul.u32 2, %s19
        %p202 = scmp.lt.s32.totalorder %s18, 1
        %s203 = scalar_select %p202, %s18, 1
        %p204 = scmp.lt.s32.totalorder %s201, 1
        %s205 = scalar_select %p204, %s201, 1
        %s206 = smul.addr %s203, 2
        %s207 = sadd.s32 %s205, %s206
        %s208 = smul.addr %s207, 4
        %s209 = scalar_lea.vmem %s0, %s208
        %s210 = smul.u32 2, %s19
      $region32: #{fre_layer_forward.3} parent=27 // pred_fallthru
        _
      // Predicated region
      $region33: #{fre_layer_forward.3} parent=27 // pred_check
        %p211 = pneg %p73
      $region34: #{fre_layer_forward.3} parent=27 // pred_check_branch
        %213 = sbr.rel (%p211) target = $region36
      $region35: #{fre_layer_forward.3} parent=27 // pred_region
        %s214 = smul.u32 2, %s19
        %p215 = scmp.lt.s32.totalorder %s18, 1
        %s216 = scalar_select %p215, %s18, 1
        %p217 = scmp.lt.s32.totalorder %s214, 1
        %s218 = scalar_select %p217, %s214, 1
        %s219 = smul.addr %s216, 2
        %s220 = sadd.s32 %s218, %s219
        %s221 = smul.addr %s220, 4
        %s222 = scalar_lea.vmem %s1, %s221
        %s223 = smul.u32 2, %s19
      $region36: #{fre_layer_forward.3} parent=27 // pred_fallthru
        _
    $region28: #{fre_layer_forward.3} parent=5 // pred_fallthru
      _
    %p224 = scmp.le.s32.totalorder 1, %s11
    %p225 = scmp.lt.s32.totalorder %s11, 3
    %p226 = pnand %p224, %p225
    %p227 = pneg %p226
    // Predicated region
    $region37: #{fre_layer_forward.3} parent=5 // pred_check
      _
    $region38: #{fre_layer_forward.3} parent=5 // pred_check_branch
      %229 = sbr.rel (%p226) target = $region40
    $region39: #{fre_layer_forward.3} parent=5 // pred_region
      %s230 = ssub.s32 %s11, 1
      %s231 = smul.u32 2, %s21
      %p232 = scmp.lt.s32.totalorder %s20, 1
      %s233 = scalar_select %p232, %s20, 1
      %p234 = scmp.lt.s32.totalorder %s231, 1
      %s235 = scalar_select %p234, %s231, 1
      %s236 = smul.addr %s233, 2
      %s237 = sadd.s32 %s235, %s236
      %s238 = smul.addr %s237, 4
      %s239 = scalar_lea.vmem %s0, %s238
      %p240 = pneg %p51
      %p241 = pneg %p48
      %s242 = smul.u32 2, %s21
      %p243 = scmp.lt.s32.totalorder %s20, 1
      %s244 = scalar_select %p243, %s20, 1
      %p245 = scmp.lt.s32.totalorder %s242, 1
      %s246 = scalar_select %p245, %s242, 1
      %s247 = smul.addr %s244, 2
      %s248 = sadd.s32 %s246, %s247
      %s249 = smul.addr %s248, 4
      %s250 = scalar_lea.vmem %s1, %s249
      %p251 = pneg %p79
      %p252 = pneg %p76
      %p253 = pneg %p100
      %p254 = pneg %p97
      %p255 = pneg %p121
      %p256 = pneg %p118
      %p257 = pneg %p142
      %p258 = pneg %p139
      %p259 = pneg %p170
      %p260 = pneg %p167
      %s261 = smul.u32 2, %s21
      %p262 = scmp.lt.s32.totalorder %s20, 1
      %s263 = scalar_select %p262, %s20, 1
      %p264 = scmp.lt.s32.totalorder %s261, 1
      %s265 = scalar_select %p264, %s261, 1
      %s266 = smul.addr %s263, 2
      %s267 = sadd.s32 %s265, %s266
      %s268 = smul.addr %s267, 4
      %s269 = scalar_lea.vmem %s5, %s268
      %s270 = smul.u32 2, %s21
      %p271 = scmp.lt.s32.totalorder %s20, 1
      %s272 = scalar_select %p271, %s20, 1
      %p273 = scmp.lt.s32.totalorder %s270, 1
      %s274 = scalar_select %p273, %s270, 1
      %s275 = smul.addr %s272, 2
      %s276 = sadd.s32 %s274, %s275
      %s277 = smul.addr %s276, 4
      %s278 = scalar_lea.vmem %s0, %s277
      %s279 = smul.u32 2, %s21
      %s280 = smul.u32 2, %s21
      %p281 = scmp.lt.s32.totalorder %s20, 1
      %s282 = scalar_select %p281, %s20, 1
      %p283 = scmp.lt.s32.totalorder %s280, 1
      %s284 = scalar_select %p283, %s280, 1
      %s285 = smul.addr %s282, 2
      %s286 = sadd.s32 %s284, %s285
      %s287 = smul.addr %s286, 4
      %s288 = scalar_lea.vmem %s1, %s287
      %s289 = smul.u32 2, %s21
      %s290 = smul.u32 2, %s21
      %p291 = scmp.lt.s32.totalorder %s20, 1
      %s292 = scalar_select %p291, %s20, 1
      %p293 = scmp.lt.s32.totalorder %s290, 1
      %s294 = scalar_select %p293, %s290, 1
      %s295 = smul.addr %s292, 2
      %s296 = sadd.s32 %s294, %s295
      %s297 = smul.addr %s296, 4
      %s298 = scalar_lea.vmem %s5, %s297
      %s299 = smul.u32 2, %s21
      %v300 = vld [vmem:[%s278] sm:$0xff]
      %v301 = vld [vmem:[%s288] sm:$0xff]
      %v302 = vmul.f32 %v300, %v301
      %v303 = vld [vmem:[%s2] sm:$0xf]
      %305 = vset.pattern.permute.xlu0 0
      %306 = vperm.xlu0 %305, %v303
      %v307 = vpop.permute.xlu0 %306
      %v309 = vunpack.c.l.s4 839922192
      %v310 = vunpack.c.0.s8 %v309
      %v311 = vperm.slane %v307, %v310
      %v313 = vmul.f32 %v302, %v311
      %v314 = vadd.f32 %v300, %v313
      %v315 = vld [vmem:[%s3] sm:$0xf]
      %v316 = vld [vmem:[%s4] sm:$0xf]
      %318 = vset.pattern.permute.xlu0 0
      %319 = vperm.xlu0 %318, %v316
      %v320 = vpop.permute.xlu0 %319
      %323 = vst [vmem:[#allocation1] ss:$2 sm:$0xff] %v314
      %v324 = vld.sshfl [vmem:[#allocation1] sm:$0xff pattern:$0x75316420]
      %v325 = vld.sshfl [vmem:[#allocation1 + $0x8] sm:$0xff pattern:$0x75316420]
      %vm326 = vcmask 31744
      %v328 = vsel %vm326, %v315, 0
      %vm330 = vcmask 1043456
      %v331 = vsel %vm330, %v324, 0
      %v333 = vsel %vm330, %v325, 0
      %335 = vmatpush.msra.mxu0 0.0
      %336 = vmatpush.msra.mxu0 0.0
      %337 = vmatpush.msra.mxu0 0.0
      %338 = vmatpush.msra.mxu0 0.0
      %339 = vmatpush.msra.mxu0 0.0
      %340 = vmatpush.msra.mxu0 0.0
      %341 = vmatpush.msra.mxu0 0.0
      %342 = vmatpush.msra.mxu0 0.0
      %343 = vmatpush.msra.mxu0 0.0
      %344 = vmatpush.msra.mxu0 0.0
      %345 = vmatpush.msra.mxu0 0.0
      %346 = vmatpush.msra.mxu0 0.0
      %347 = vmatpush.msra.mxu0 0.0
      %348 = vmatpush.msra.mxu0 0.0
      %349 = vmatpush.msra.mxu0 0.0
      %350 = vmatpush.msra.mxu0 %v331
      %351 = vmatmul.f32.gmra.mxu0 %v328
      %v352 = vpop.f32.mrf.mxu0
      %v353 = vadd.f32 %v320, %v352
      %354 = vdwg.mxu0
      %355 = vmatpush.msra.mxu0 0.0
      %356 = vmatpush.msra.mxu0 0.0
      %357 = vmatpush.msra.mxu0 0.0
      %358 = vmatpush.msra.mxu0 0.0
      %359 = vmatpush.msra.mxu0 0.0
      %360 = vmatpush.msra.mxu0 0.0
      %361 = vmatpush.msra.mxu0 0.0
      %362 = vmatpush.msra.mxu0 0.0
      %363 = vmatpush.msra.mxu0 0.0
      %364 = vmatpush.msra.mxu0 0.0
      %365 = vmatpush.msra.mxu0 0.0
      %366 = vmatpush.msra.mxu0 0.0
      %367 = vmatpush.msra.mxu0 0.0
      %368 = vmatpush.msra.mxu0 0.0
      %369 = vmatpush.msra.mxu0 0.0
      %370 = vmatpush.msra.mxu0 %v333
      %371 = vmatmul.f32.gmra.mxu0 %v328
      %v372 = vpop.f32.mrf.mxu0
      %v373 = vadd.f32 %v320, %v372
      %374 = vdwg.mxu0
      %v377 = vrot.slane %v373, 4
      %v378 = vsel %vm330, %v353, %v377
      %380 = vst [vmem:[%s298] sm:$0xff] %v378
      %s381 = smul.u32 2, %s21
      %p382 = scmp.lt.s32.totalorder %s20, 1
      %s383 = scalar_select %p382, %s20, 1
      %p384 = scmp.lt.s32.totalorder %s381, 1
      %s385 = scalar_select %p384, %s381, 1
      %s386 = smul.addr %s383, 2
      %s387 = sadd.s32 %s385, %s386
      %s388 = smul.addr %s387, 4
      %s389 = scalar_lea.vmem %s5, %s388
      // Predicated region
      $region41: #{fre_layer_forward.3} parent=39 // pred_check
        %p390 = pneg %p167
      $region42: #{fre_layer_forward.3} parent=39 // pred_check_branch
        %392 = sbr.rel (%p390) target = $region44
      $region43: #{fre_layer_forward.3} parent=39 // pred_region
        %s393 = smul.u32 2, %s21
      $region44: #{fre_layer_forward.3} parent=39 // pred_fallthru
        _
    $region40: #{fre_layer_forward.3} parent=5 // pred_fallthru
      _
    %p394 = scmp.le.s32.totalorder 2, %s11
    // Predicated region
    $region45: #{fre_layer_forward.3} parent=5 // pred_check
      %p395 = pneg %p394
    $region46: #{fre_layer_forward.3} parent=5 // pred_check_branch
      %397 = sbr.rel (%p395) target = $region48
    $region47: #{fre_layer_forward.3} parent=5 // pred_region
      %s398 = ssub.s32 %s11, 2
      // Predicated region
      $region49: #{fre_layer_forward.3} parent=47 // pred_check
        %p399 = pneg %p173
      $region50: #{fre_layer_forward.3} parent=47 // pred_check_branch
        %401 = sbr.rel (%p399) target = $region52
      $region51: #{fre_layer_forward.3} parent=47 // pred_region
        %s402 = smul.u32 2, %s23
        %p403 = scmp.lt.s32.totalorder %s22, 1
        %s404 = scalar_select %p403, %s22, 1
        %p405 = scmp.lt.s32.totalorder %s402, 1
        %s406 = scalar_select %p405, %s402, 1
        %s407 = smul.addr %s404, 2
        %s408 = sadd.s32 %s406, %s407
        %s409 = smul.addr %s408, 4
        %s410 = scalar_lea.vmem %s5, %s409
      $region52: #{fre_layer_forward.3} parent=47 // pred_fallthru
        _
    $region48: #{fre_layer_forward.3} parent=5 // pred_fallthru
      _
  $region6: #{fre_layer_forward.3} parent=0 // loop_footer
    %s15 = sadd.s32 1, %s11
  $region7: #{fre_layer_forward.3} parent=0 // loop_footer_branch
    %10 = sbr.rel target = $region3
  $region8: #{fre_layer_forward.3} parent=0 // loop_exit
    _

</llo_original>
